<compile_context>
chip_gen: v6e
topology: v6e:2x2x1
jax: 0.10.0
libtpu: 0.0.40
codegen_flags: <defaults>
</compile_context>

<pallas_src>
import numpy as np
import jax
import jax.numpy as jnp
from jax import lax
from jax.experimental import pallas as pl
from jax.experimental.pallas import tpu as pltpu

PATCH = 8
PP = PATCH * PATCH          # 64 pixels per 8x8 patch
LANE = 2 * PP               # 128: two patches packed per row (lane-dense)

# ---- packed 2-patch / 2D-DFT matrices (kron of two 8-point DFTs) -----------
# Row layout of a kernel-B input row: [patch0(64) | patch1(64)]  (128 lanes).
# Forward (128,256): columns = [p0_real | p1_real | p0_imag | p1_imag].
# Inverse (256,128): rows    = [P0r | P1r | P0i | P1i] -> [out0 | out1] / 64.
_idx = np.arange(PATCH)
_w1 = np.exp(-2j * np.pi * np.outer(_idx, _idx) / PATCH)
_F = np.kron(_w1, _w1)                                    # (64, 64), symmetric
_FR = np.real(_F).astype(np.float32)
_FI = np.imag(_F).astype(np.float32)
_I2 = np.eye(2, dtype=np.float32)
DFT_FWD2 = jnp.asarray(np.concatenate(
    [np.kron(_I2, _FR), np.kron(_I2, _FI)], axis=1))                      # (128, 256)
DFT_INV2 = jnp.asarray(np.concatenate(
    [np.kron(_I2, _FR), np.kron(_I2, _FI)], axis=0) / PP)                 # (256, 128)


def _vmem_limit_bytes():
    """Generation-aware scoped-VMEM budget (falls back to a safe constant)."""
    try:
        cap = int(pltpu.get_tpu_info().vmem_capacity_bytes)
        return min(3 * cap // 4, 100 * 1024 * 1024)
    except Exception:
        return 48 * 1024 * 1024


def _row_tile(n, cap):
    """Largest divisor of n that is <= cap and a multiple of 8 (else n).

    NOTE: falls back to n itself when no such divisor exists (keeps the
    (8,128) block rule satisfied); for awkward very large n this means one
    whole-array block -- pad HW upstream in that case.
    """
    if n <= cap:
        return n
    for d in range(cap, 7, -1):
        if n % d == 0 and d % 8 == 0:
            return d
    return n


# ----------------------------- Pallas kernels ------------------------------

def _ln_hidden_dw_kernel(x_ref, lnw_ref, lnb_ref, thw_ref, thb_ref,
                         dww_ref, dwb_ref, qk_ref, v_ref, pad_ref):
    # x_ref:   (1, H, W, C)        one batch image (NHWC)
    # thw_ref: (C, 6C)             to_hidden 1x1 weight (q|k|v merged)
    # dww_ref: (9, 6C)             depthwise 3x3 taps
    # qk_ref:  (1, H, W, 4C)       q|k hidden slab  (feeds the freq branch)
    # v_ref:   (1, H, W, 2C)       v hidden slab    (feeds kernel C)
    # pad_ref: (H+2, W+2, 6C)      VMEM scratch: zero-bordered halo
    _, H, W, C = x_ref.shape
    G6 = thw_ref.shape[-1]
    G4 = qk_ref.shape[-1]

    # WithBias LayerNorm over channels (biased variance) -- computed once.
    x = x_ref[...].reshape(H * W, C).astype(jnp.float32)
    mu = jnp.mean(x, axis=-1, keepdims=True)
    var = jnp.mean((x - mu) ** 2, axis=-1, keepdims=True)
    n1 = (x - mu) * lax.rsqrt(var + 1e-5) * lnw_ref[...] + lnb_ref[...]

    # to_hidden 1x1 conv, all 6C output channels in one matmul.
    h = jnp.dot(n1, thw_ref[...], preferred_element_type=jnp.float32) + thb_ref[...]
    h = h.reshape(H, W, G6)

    # depthwise 3x3, SAME padding.  Interior of the scratch is fully
    # overwritten every step, so only the 1-px border needs zeroing (removes
    # the full zero-fill store pass flagged by the review).
    pad_ref[1:H + 1, 1:W + 1, :] = h
    pad_ref[0:1, :, :] = jnp.zeros((1, W + 2, G6), jnp.float32)
    pad_ref[H + 1:H + 2, :, :] = jnp.zeros((1, W + 2, G6), jnp.float32)
    pad_ref[:, 0:1, :] = jnp.zeros((H + 2, 1, G6), jnp.float32)
    pad_ref[:, W + 1:W + 2, :] = jnp.zeros((H + 2, 1, G6), jnp.float32)

    dww = dww_ref[...]
    acc = jnp.zeros((H, W, G6), jnp.float32)
    for dy in range(3):
        for dx in range(3):
            tap = dww[dy * 3 + dx:dy * 3 + dx + 1, :]                 # (1, 6C)
            acc = acc + pad_ref[dy:dy + H, dx:dx + W, :] * tap
    acc = acc + dwb_ref[...]

    qk_ref[...] = acc[:, :, :G4].reshape(qk_ref.shape).astype(qk_ref.dtype)
    v_ref[...] = acc[:, :, G4:].reshape(v_ref.shape).astype(v_ref.dtype)


def _freq_kernel(q_ref, k_ref, fwd_ref, inv_ref, o_ref):
    # Per-8x8-patch circular convolution via packed DFT matmuls.
    # Two patches per row -> 128-lane-dense loads/stores, and the real/imag
    # halves are whole 128-lane vregs (no sub-vreg lane compaction).
    half = q_ref.shape[-1]                                 # 128
    qf = jnp.dot(q_ref[...], fwd_ref[...], preferred_element_type=jnp.float32)
    kf = jnp.dot(k_ref[...], fwd_ref[...], preferred_element_type=jnp.float32)
    qr, qi = qf[:, :half], qf[:, half:]
    kr, ki = kf[:, :half], kf[:, half:]
    p = jnp.concatenate([qr * kr - qi * ki, qr * ki + qi * kr], axis=-1)
    out = jnp.dot(p, inv_ref[...], preferred_element_type=jnp.float32)
    o_ref[...] = out.astype(o_ref.dtype)


def _attn_ffn_kernel(corr_ref, v_ref, x_ref, alpha_ref,
                     law_ref, lab_ref, pow_ref, pob_ref,
                     l2w_ref, l2b_ref, fiw_ref, fib_ref, fow_ref, fob_ref,
                     o_ref):
    T = corr_ref.shape[1]
    C2 = corr_ref.shape[2]
    C = x_ref.shape[2]

    # WithBias LayerNorm over the 2C frequency-correlation channels.
    corr = corr_ref[...].reshape(T, C2).astype(jnp.float32)
    mu = jnp.mean(corr, axis=-1, keepdims=True)
    var = jnp.mean((corr - mu) ** 2, axis=-1, keepdims=True)
    normed = (corr - mu) * lax.rsqrt(var + 1e-5) * law_ref[...] + lab_ref[...]

    # gate with v and project_out (1x1 conv).
    v = v_ref[...].reshape(T, C2).astype(jnp.float32)
    attn = jnp.dot(v * normed, pow_ref[...],
                   preferred_element_type=jnp.float32) + pob_ref[...]

    # alpha residual (alpha precomputed in the wrapper: one dot per batch).
    alpha = alpha_ref[...].reshape(1, C)
    x1 = x_ref[...].reshape(T, C).astype(jnp.float32) + alpha * attn

    # FFN(norm2(x1)) + residual, resident in VMEM.
    mu2 = jnp.mean(x1, axis=-1, keepdims=True)
    var2 = jnp.mean((x1 - mu2) ** 2, axis=-1, keepdims=True)
    n2 = (x1 - mu2) * lax.rsqrt(var2 + 1e-5) * l2w_ref[...] + l2b_ref[...]
    h = jnp.dot(n2, fiw_ref[...], preferred_element_type=jnp.float32) + fib_ref[...]
    h = jax.nn.gelu(h, approximate=False)   # exact erf GELU, matches nn.GELU()
    out = x1 + jnp.dot(h, fow_ref[...], preferred_element_type=jnp.float32) + fob_ref[...]
    o_ref[...] = out.reshape(o_ref.shape).astype(o_ref.dtype)


# ------------------------------ wrappers ------------------------------------

def ln_to_hidden_dwconv(x_nhwc, lnw, lnb, thw, thb, dww, dwb):
    B, H, W, C = x_nhwc.shape
    G6 = thw.shape[-1]                                      # 6C
    G4 = 2 * G6 // 3                                        # 4C (q|k)
    G2 = G6 // 3                                            # 2C (v)
    flops = B * (2 * H * W * C * G6 + 18 * H * W * G6 + 10 * H * W * C)
    bytes_acc = 4 * (B * H * W * (C + G6) + C * G6 + 12 * G6 + 2 * C)
    return pl.pallas_call(
        _ln_hidden_dw_kernel,
        out_shape=(jax.ShapeDtypeStruct((B, H, W, G4), x_nhwc.dtype),
                   jax.ShapeDtypeStruct((B, H, W, G2), x_nhwc.dtype)),
        grid=(B,),
        in_specs=[pl.BlockSpec((1, H, W, C), lambda b: (b, 0, 0, 0)),
                  pl.BlockSpec((1, C), lambda b: (0, 0)),
                  pl.BlockSpec((1, C), lambda b: (0, 0)),
                  pl.BlockSpec((C, G6), lambda b: (0, 0)),
                  pl.BlockSpec((1, G6), lambda b: (0, 0)),
                  pl.BlockSpec((9, G6), lambda b: (0, 0)),
                  pl.BlockSpec((1, G6), lambda b: (0, 0))],
        out_specs=(pl.BlockSpec((1, H, W, G4), lambda b: (b, 0, 0, 0)),
                   pl.BlockSpec((1, H, W, G2), lambda b: (b, 0, 0, 0))),
        scratch_shapes=[pltpu.VMEM((H + 2, W + 2, G6), jnp.float32)],
        compiler_params=pltpu.CompilerParams(
            dimension_semantics=("parallel",),
            vmem_limit_bytes=_vmem_limit_bytes()),
        cost_estimate=pl.CostEstimate(flops=flops,
                                      transcendentals=B * H * W,
                                      bytes_accessed=bytes_acc),
    )(x_nhwc, lnw, lnb, thw, thb, dww, dwb)


def freq_circular_conv(q_pairs, k_pairs):
    n, lanes = q_pairs.shape                                # lanes == 128
    t = _row_tile(n, 4096)                                  # big tiles amortize step overhead
    per_row = 2 * (2 * lanes * 2 * lanes) + 2 * 2 * lanes * lanes + 6 * lanes
    flops = n * per_row
    bytes_acc = 4 * (3 * n * lanes + 2 * lanes * 2 * lanes)
    return pl.pallas_call(
        _freq_kernel,
        out_shape=jax.ShapeDtypeStruct((n, lanes), q_pairs.dtype),
        grid=(n // t,),
        in_specs=[pl.BlockSpec((t, lanes), lambda i: (i, 0)),
                  pl.BlockSpec((t, lanes), lambda i: (i, 0)),
                  pl.BlockSpec((lanes, 2 * lanes), lambda i: (0, 0)),
                  pl.BlockSpec((2 * lanes, lanes), lambda i: (0, 0))],
        out_specs=pl.BlockSpec((t, lanes), lambda i: (i, 0)),
        compiler_params=pltpu.CompilerParams(
            dimension_semantics=("parallel",),
            vmem_limit_bytes=_vmem_limit_bytes()),
        cost_estimate=pl.CostEstimate(flops=flops,
                                      transcendentals=0,
                                      bytes_accessed=bytes_acc),
    )(q_pairs, k_pairs, DFT_FWD2, DFT_INV2)


def attn_ffn_fused(corr, v_tok, x_tok, alpha, params):
    B, HW, C = x_tok.shape
    C2 = corr.shape[-1]
    T = _row_tile(HW, 1024)
    flops = B * HW * (2 * C2 * C + 16 * C * C + 30 * (C + C2))
    bytes_acc = 4 * (B * HW * (2 * C2 + 2 * C) + C2 * C + 8 * C * C + 12 * C)
    return pl.pallas_call(
        _attn_ffn_kernel,
        out_shape=jax.ShapeDtypeStruct((B, HW, C), x_tok.dtype),
        grid=(B, HW // T),
        in_specs=[pl.BlockSpec((1, T, C2), lambda b, t: (b, t, 0)),        # corr
                  pl.BlockSpec((1, T, C2), lambda b, t: (b, t, 0)),        # v
                  pl.BlockSpec((1, T, C), lambda b, t: (b, t, 0)),         # x tokens
                  pl.BlockSpec((1, 1, C), lambda b, t: (b, 0, 0)),         # alpha (hoisted)
                  pl.BlockSpec((1, C2), lambda b, t: (0, 0)),              # lnA_w
                  pl.BlockSpec((1, C2), lambda b, t: (0, 0)),              # lnA_b
                  pl.BlockSpec((C2, C), lambda b, t: (0, 0)),              # po_w
                  pl.BlockSpec((1, C), lambda b, t: (0, 0)),               # po_b
                  pl.BlockSpec((1, C), lambda b, t: (0, 0)),               # ln2_w
                  pl.BlockSpec((1, C), lambda b, t: (0, 0)),               # ln2_b
                  pl.BlockSpec((C, 4 * C), lambda b, t: (0, 0)),           # fi_w
                  pl.BlockSpec((1, 4 * C), lambda b, t: (0, 0)),           # fi_b
                  pl.BlockSpec((4 * C, C), lambda b, t: (0, 0)),           # fo_w
                  pl.BlockSpec((1, C), lambda b, t: (0, 0))],              # fo_b
        out_specs=pl.BlockSpec((1, T, C), lambda b, t: (b, t, 0)),
        compiler_params=pltpu.CompilerParams(
            dimension_semantics=("parallel", "parallel"),
            vmem_limit_bytes=_vmem_limit_bytes()),
        cost_estimate=pl.CostEstimate(flops=flops,
                                      transcendentals=B * HW * 4 * C,
                                      bytes_accessed=bytes_acc),
    )(corr, v_tok, x_tok, alpha,
      params['lnA_w'], params['lnA_b'], params['po_w'], params['po_b'],
      params['ln2_w'], params['ln2_b'],
      params['fi_w'], params['fi_b'], params['fo_w'], params['fo_b'])


# ------------------------------ glue (plain JAX) ----------------------------

def _to_patch_pairs(z_nhwc):
    # TODO(synk): fold this relayout into kernel A's output (in-VMEM patchify)
    # to remove the remaining HBM transpose passes.
    B, H, W, Cz = z_nhwc.shape
    p = PATCH
    t = z_nhwc.reshape(B, H // p, p, W // p, p, Cz)
    t = t.transpose(0, 5, 1, 3, 2, 4)                      # (B, C, Hb, Wb, p, p)
    return t.reshape(B * Cz * (H // p) * (W // p) // 2, LANE)   # 2 patches / row


def _from_patch_pairs(pairs, B, H, W, C):
    p = PATCH
    t = pairs.reshape(B, C, H // p, W // p, p, p)
    t = t.transpose(0, 2, 4, 3, 5, 1)                      # (B, Hb, p, Wb, p, C)
    return t.reshape(B, H, W, C)


def transformer_block_freq_embed(x_nchw, rep, params):
    B, C, H, W = x_nchw.shape
    HW = H * W
    C2 = 2 * C
    x = jnp.transpose(x_nchw, (0, 2, 3, 1))                # NHWC

    # Kernel A: fused LN(norm1) + to_hidden(6C) 1x1 + depthwise 3x3 (merged q/k/v).
    qk, v = ln_to_hidden_dwconv(x, params['ln1_w'], params['ln1_b'],
                                params['th_w'], params['th_b'],
                                params['dw_w'], params['dw_b'])

    # Kernel B: exact per-8x8-patch rfft2/irfft2 circular conv, 2 patches / 128 lanes.
    corr = freq_circular_conv(_to_patch_pairs(qk[..., :C2]),
                              _to_patch_pairs(qk[..., C2:]))
    corr = _from_patch_pairs(corr, B, H, W, C2).reshape(B, HW, C2)

    # alpha = Conv2d(256, C, 1, bias=False)(rep): hoisted out of kernel C.
    alpha = jnp.dot(rep, params['alpha_w']).reshape(B, 1, C)

    # Kernel C: LN(2C) -> v*gate -> project_out -> alpha residual -> LN -> FFN -> residual.
    out_tok = attn_ffn_fused(corr, v.reshape(B, HW, C2),
                             x.reshape(B, HW, C), alpha, params)
    return jnp.transpose(out_tok.reshape(B, H, W, C), (0, 3, 1, 2))   # back to NCHW


# ------------------------- deterministic parameters -------------------------

def init_params(key, C):
    keys = jax.random.split(key, 18)

    def wmat(k, cin, cout):
        return jax.random.normal(k, (cin, cout), jnp.float32) / np.sqrt(cin)

    def bvec(k, cout):
        return 0.1 * jax.random.normal(k, (1, cout), jnp.float32)

    def ln(kw, kb, c):
        return (1.0 + 0.1 * jax.random.normal(kw, (1, c), jnp.float32),
                0.1 * jax.random.normal(kb, (1, c), jnp.float32))

    ln1_w, ln1_b = ln(keys[0], keys[1], C)
    ln2_w, ln2_b = ln(keys[2], keys[3], C)
    lnA_w, lnA_b = ln(keys[4], keys[5], 2 * C)
    return dict(
        ln1_w=ln1_w, ln1_b=ln1_b,
        ln2_w=ln2_w, ln2_b=ln2_b,
        lnA_w=lnA_w, lnA_b=lnA_b,
        alpha_w=wmat(keys[6], 256, C),
        th_w=wmat(keys[7], C, 6 * C), th_b=bvec(keys[8], 6 * C),
        dw_w=jax.random.normal(keys[9], (9, 6 * C), jnp.float32) / 3.0,
        dw_b=bvec(keys[10], 6 * C),
        po_w=wmat(keys[11], 2 * C, C), po_b=bvec(keys[12], C),
        fi_w=wmat(keys[13], C, 4 * C), fi_b=bvec(keys[14], 4 * C),
        fo_w=wmat(keys[15], 4 * C, C), fo_b=bvec(keys[16], C),
    )


# --------------------------- pure-JAX reference ------------------------------

def reference(x_nchw, rep, params):
    B, C, H, W = x_nchw.shape

    def ln_nchw(z, w, b):
        t = jnp.transpose(z, (0, 2, 3, 1))
        mu = t.mean(-1, keepdims=True)
        var = ((t - mu) ** 2).mean(-1, keepdims=True)
        y = (t - mu) / jnp.sqrt(var + 1e-5) * w.reshape(-1) + b.reshape(-1)
        return jnp.transpose(y, (0, 3, 1, 2))

    def conv1x1(z, wmat, bias):
        return jnp.einsum('bchw,cd->bdhw', z, wmat) + bias.reshape(1, -1, 1, 1)

    def dwconv(z, w9c, bias):
        Cz = z.shape[1]
        wk = jnp.transpose(w9c, (1, 0)).reshape(Cz, 1, 3, 3)
        y = lax.conv_general_dilated(z, wk, (1, 1), ((1, 1), (1, 1)),
                                     feature_group_count=Cz,
                                     dimension_numbers=('NCHW', 'OIHW', 'NCHW'))
        return y + bias.reshape(1, -1, 1, 1)

    alpha = jnp.einsum('bi,ic->bc', rep, params['alpha_w']).reshape(B, C, 1, 1)
    n1 = ln_nchw(x_nchw, params['ln1_w'], params['ln1_b'])
    hidden = conv1x1(n1, params['th_w'], params['th_b'])
    hidden = dwconv(hidden, params['dw_w'], params['dw_b'])
    q, k, v = jnp.split(hidden, 3, axis=1)
    p = PATCH

    def patchify(z):
        Bz, Cz, Hz, Wz = z.shape
        return z.reshape(Bz, Cz, Hz // p, p, Wz // p, p).transpose(0, 1, 2, 4, 3, 5)

    of = jnp.fft.rfft2(patchify(q)) * jnp.fft.rfft2(patchify(k))
    o = jnp.fft.irfft2(of, s=(p, p))
    o = o.transpose(0, 1, 2, 4, 3, 5).reshape(B, 2 * C, H, W)
    o = ln_nchw(o, params['lnA_w'], params['lnA_b'])
    attn = conv1x1(v * o, params['po_w'], params['po_b'])
    x1 = x_nchw + alpha * attn
    n2 = ln_nchw(x1, params['ln2_w'], params['ln2_b'])
    h = jax.nn.gelu(conv1x1(n2, params['fi_w'], params['fi_b']), approximate=False)
    return x1 + conv1x1(h, params['fo_w'], params['fo_b'])


# ---------------------------------- main -------------------------------------

if __name__ == "__main__":
    key = jax.random.PRNGKey(0)
    B, C, H, W = 2, 4, 16, 16
    kx, kr, kp = jax.random.split(key, 3)
    x = jax.random.normal(kx, (B, C, H, W), jnp.float32)
    rep = jax.random.normal(kr, (B, 256), jnp.float32)
    params = init_params(kp, C)

    out = jax.block_until_ready(transformer_block_freq_embed(x, rep, params))
    ref = jax.block_until_ready(reference(x, rep, params))

    maxdiff = float(jnp.max(jnp.abs(out - ref)))
    tol = 2e-2 * (1.0 + float(jnp.max(jnp.abs(ref))))
    assert out.shape == (B, C, H, W)
    assert maxdiff < tol, f"max diff {maxdiff} vs tol {tol}"
    print("KERNEL_OK")
</pallas_src>

<mosaic_0001>
module attributes {stable_mosaic.version = 11 : i64} {
  func.func @_ln_hidden_dw_kernel(%arg0: i32, %arg1: memref<1x16x16x4xf32, #tpu.memory_space<vmem>>, %arg2: memref<1x4xf32, #tpu.memory_space<vmem>>, %arg3: memref<1x4xf32, #tpu.memory_space<vmem>>, %arg4: memref<4x24xf32, #tpu.memory_space<vmem>>, %arg5: memref<1x24xf32, #tpu.memory_space<vmem>>, %arg6: memref<9x24xf32, #tpu.memory_space<vmem>>, %arg7: memref<1x24xf32, #tpu.memory_space<vmem>>, %arg8: memref<1x16x16x16xf32, #tpu.memory_space<vmem>>, %arg9: memref<1x16x16x8xf32, #tpu.memory_space<vmem>>, %arg10: memref<18x18x24xf32, #tpu.memory_space<vmem>>) attributes {dimension_semantics = [#tpu.dimension_semantics<parallel>], iteration_bounds = array<i64: 2>, scalar_prefetch = 0 : i64, scratch_operands = 1 : i64, tpu.core_type = #tpu.core_type<tc>, window_params = [{transform_indices = @transform_0, window_bounds = array<i64: 1, 16, 16, 4>}, {pipeline_mode = #tpu.pipeline_mode<synchronous>, transform_indices = @transform_1, window_bounds = array<i64: 1, 4>}, {pipeline_mode = #tpu.pipeline_mode<synchronous>, transform_indices = @transform_2, window_bounds = array<i64: 1, 4>}, {pipeline_mode = #tpu.pipeline_mode<synchronous>, transform_indices = @transform_3, window_bounds = array<i64: 4, 24>}, {pipeline_mode = #tpu.pipeline_mode<synchronous>, transform_indices = @transform_4, window_bounds = array<i64: 1, 24>}, {pipeline_mode = #tpu.pipeline_mode<synchronous>, transform_indices = @transform_5, window_bounds = array<i64: 9, 24>}, {pipeline_mode = #tpu.pipeline_mode<synchronous>, transform_indices = @transform_6, window_bounds = array<i64: 1, 24>}, {transform_indices = @transform_7, window_bounds = array<i64: 1, 16, 16, 16>}, {transform_indices = @transform_8, window_bounds = array<i64: 1, 16, 16, 8>}]} {
    %c0 = arith.constant 0 : index
    %c0_0 = arith.constant 0 : index
    %c0_1 = arith.constant 0 : index
    %c0_2 = arith.constant 0 : index
    %0 = vector.load %arg1[%c0, %c0_0, %c0_1, %c0_2] : memref<1x16x16x4xf32, #tpu.memory_space<vmem>>, vector<1x16x16x4xf32>
    %1 = vector.shape_cast %0 : vector<1x16x16x4xf32> to vector<256x4xf32>
    %cst = arith.constant dense<0.000000e+00> : vector<256xf32>
    %2 = vector.multi_reduction <add>, %1, %cst [1] : vector<256x4xf32> to vector<256xf32>
    %3 = vector.shape_cast %2 : vector<256xf32> to vector<256x1xf32>
    %cst_3 = arith.constant 4.000000e+00 : f32
    %4 = vector.broadcast %cst_3 : f32 to vector<256x1xf32>
    %5 = arith.divf %3, %4 : vector<256x1xf32>
    %6 = vector.broadcast %5 : vector<256x1xf32> to vector<256x4xf32>
    %7 = arith.subf %1, %6 : vector<256x4xf32>
    %8 = arith.mulf %7, %7 : vector<256x4xf32>
    %cst_4 = arith.constant dense<0.000000e+00> : vector<256xf32>
    %9 = vector.multi_reduction <add>, %8, %cst_4 [1] : vector<256x4xf32> to vector<256xf32>
    %10 = vector.shape_cast %9 : vector<256xf32> to vector<256x1xf32>
    %cst_5 = arith.constant 4.000000e+00 : f32
    %11 = vector.broadcast %cst_5 : f32 to vector<256x1xf32>
    %12 = arith.divf %10, %11 : vector<256x1xf32>
    %13 = vector.broadcast %5 : vector<256x1xf32> to vector<256x4xf32>
    %14 = arith.subf %1, %13 : vector<256x4xf32>
    %cst_6 = arith.constant 9.99999974E-6 : f32
    %15 = vector.broadcast %cst_6 : f32 to vector<256x1xf32>
    %16 = arith.addf %12, %15 : vector<256x1xf32>
    %17 = math.rsqrt %16 : vector<256x1xf32>
    %18 = vector.broadcast %17 : vector<256x1xf32> to vector<256x4xf32>
    %19 = arith.mulf %14, %18 : vector<256x4xf32>
    %c0_7 = arith.constant 0 : index
    %c0_8 = arith.constant 0 : index
    %20 = vector.load %arg2[%c0_7, %c0_8] : memref<1x4xf32, #tpu.memory_space<vmem>>, vector<1x4xf32>
    %21 = vector.broadcast %20 : vector<1x4xf32> to vector<256x4xf32>
    %22 = arith.mulf %19, %21 : vector<256x4xf32>
    %c0_9 = arith.constant 0 : index
    %c0_10 = arith.constant 0 : index
    %23 = vector.load %arg3[%c0_9, %c0_10] : memref<1x4xf32, #tpu.memory_space<vmem>>, vector<1x4xf32>
    %24 = vector.broadcast %23 : vector<1x4xf32> to vector<256x4xf32>
    %25 = arith.addf %22, %24 : vector<256x4xf32>
    %c0_11 = arith.constant 0 : index
    %c0_12 = arith.constant 0 : index
    %26 = vector.load %arg4[%c0_11, %c0_12] : memref<4x24xf32, #tpu.memory_space<vmem>>, vector<4x24xf32>
    %cst_13 = arith.constant dense<0.000000e+00> : vector<256x24xf32>
    %27 = tpu.matmul %25, %26, %cst_13 {dimension_numbers = #tpu.dot_dimension_numbers<[1], [0], [0], [1], [0, 0, 1, 1], [], []>} : vector<256x4xf32>, vector<4x24xf32>, vector<256x24xf32> -> vector<256x24xf32>
    %c0_14 = arith.constant 0 : index
    %c0_15 = arith.constant 0 : index
    %28 = vector.load %arg5[%c0_14, %c0_15] : memref<1x24xf32, #tpu.memory_space<vmem>>, vector<1x24xf32>
    %29 = vector.broadcast %28 : vector<1x24xf32> to vector<256x24xf32>
    %30 = arith.addf %27, %29 : vector<256x24xf32>
    %31 = vector.shape_cast %30 : vector<256x24xf32> to vector<16x16x24xf32>
    %c1 = arith.constant 1 : index
    %c1_16 = arith.constant 1 : index
    %c0_17 = arith.constant 0 : index
    %32 = vector.load %arg10[%c1, %c1_16, %c0_17] : memref<18x18x24xf32, #tpu.memory_space<vmem>>, vector<16x16x24xf32>
    tpu.vector_store %arg10[%c1, %c1_16, %c0_17], %31 {strides = array<i32>} : memref<18x18x24xf32, #tpu.memory_space<vmem>>, vector<16x16x24xf32>,
    %cst_18 = arith.constant 0.000000e+00 : f32
    %33 = vector.broadcast %cst_18 : f32 to vector<1x18x24xf32>
    %c0_19 = arith.constant 0 : index
    %c0_20 = arith.constant 0 : index
    %c0_21 = arith.constant 0 : index
    %34 = vector.load %arg10[%c0_19, %c0_20, %c0_21] : memref<18x18x24xf32, #tpu.memory_space<vmem>>, vector<1x18x24xf32>
    tpu.vector_store %arg10[%c0_19, %c0_20, %c0_21], %33 {strides = array<i32>} : memref<18x18x24xf32, #tpu.memory_space<vmem>>, vector<1x18x24xf32>,
    %cst_22 = arith.constant 0.000000e+00 : f32
    %35 = vector.broadcast %cst_22 : f32 to vector<1x18x24xf32>
    %c17 = arith.constant 17 : index
    %c0_23 = arith.constant 0 : index
    %c0_24 = arith.constant 0 : index
    %36 = vector.load %arg10[%c17, %c0_23, %c0_24] : memref<18x18x24xf32, #tpu.memory_space<vmem>>, vector<1x18x24xf32>
    tpu.vector_store %arg10[%c17, %c0_23, %c0_24], %35 {strides = array<i32>} : memref<18x18x24xf32, #tpu.memory_space<vmem>>, vector<1x18x24xf32>,
    %cst_25 = arith.constant 0.000000e+00 : f32
    %37 = vector.broadcast %cst_25 : f32 to vector<18x1x24xf32>
    %c0_26 = arith.constant 0 : index
    %c0_27 = arith.constant 0 : index
    %c0_28 = arith.constant 0 : index
    %38 = vector.load %arg10[%c0_26, %c0_27, %c0_28] : memref<18x18x24xf32, #tpu.memory_space<vmem>>, vector<18x1x24xf32>
    tpu.vector_store %arg10[%c0_26, %c0_27, %c0_28], %37 {strides = array<i32>} : memref<18x18x24xf32, #tpu.memory_space<vmem>>, vector<18x1x24xf32>,
    %cst_29 = arith.constant 0.000000e+00 : f32
    %39 = vector.broadcast %cst_29 : f32 to vector<18x1x24xf32>
    %c0_30 = arith.constant 0 : index
    %c17_31 = arith.constant 17 : index
    %c0_32 = arith.constant 0 : index
    %40 = vector.load %arg10[%c0_30, %c17_31, %c0_32] : memref<18x18x24xf32, #tpu.memory_space<vmem>>, vector<18x1x24xf32>
    tpu.vector_store %arg10[%c0_30, %c17_31, %c0_32], %39 {strides = array<i32>} : memref<18x18x24xf32, #tpu.memory_space<vmem>>, vector<18x1x24xf32>,
    %c0_33 = arith.constant 0 : index
    %c0_34 = arith.constant 0 : index
    %41 = vector.load %arg6[%c0_33, %c0_34] : memref<9x24xf32, #tpu.memory_space<vmem>>, vector<9x24xf32>
    %cst_35 = arith.constant 0.000000e+00 : f32
    %42 = vector.broadcast %cst_35 : f32 to vector<16x16x24xf32>
    %43 = vector.extract_strided_slice %41 {offsets = [0, 0], sizes = [1, 24], strides = [1, 1]} : vector<9x24xf32> to vector<1x24xf32>
    %c0_36 = arith.constant 0 : index
    %c0_37 = arith.constant 0 : index
    %c0_38 = arith.constant 0 : index
    %44 = vector.load %arg10[%c0_36, %c0_37, %c0_38] : memref<18x18x24xf32, #tpu.memory_space<vmem>>, vector<16x16x24xf32>
    %45 = vector.shape_cast %43 : vector<1x24xf32> to vector<1x1x24xf32>
    %46 = vector.broadcast %45 : vector<1x1x24xf32> to vector<16x16x24xf32>
    %47 = arith.mulf %44, %46 : vector<16x16x24xf32>
    %48 = arith.addf %42, %47 : vector<16x16x24xf32>
    %49 = vector.extract_strided_slice %41 {offsets = [1, 0], sizes = [1, 24], strides = [1, 1]} : vector<9x24xf32> to vector<1x24xf32>
    %c0_39 = arith.constant 0 : index
    %c1_40 = arith.constant 1 : index
    %c0_41 = arith.constant 0 : index
    %50 = vector.load %arg10[%c0_39, %c1_40, %c0_41] : memref<18x18x24xf32, #tpu.memory_space<vmem>>, vector<16x16x24xf32>
    %51 = vector.shape_cast %49 : vector<1x24xf32> to vector<1x1x24xf32>
    %52 = vector.broadcast %51 : vector<1x1x24xf32> to vector<16x16x24xf32>
    %53 = arith.mulf %50, %52 : vector<16x16x24xf32>
    %54 = arith.addf %48, %53 : vector<16x16x24xf32>
    %55 = vector.extract_strided_slice %41 {offsets = [2, 0], sizes = [1, 24], strides = [1, 1]} : vector<9x24xf32> to vector<1x24xf32>
    %c0_42 = arith.constant 0 : index
    %c2 = arith.constant 2 : index
    %c0_43 = arith.constant 0 : index
    %56 = vector.load %arg10[%c0_42, %c2, %c0_43] : memref<18x18x24xf32, #tpu.memory_space<vmem>>, vector<16x16x24xf32>
    %57 = vector.shape_cast %55 : vector<1x24xf32> to vector<1x1x24xf32>
    %58 = vector.broadcast %57 : vector<1x1x24xf32> to vector<16x16x24xf32>
    %59 = arith.mulf %56, %58 : vector<16x16x24xf32>
    %60 = arith.addf %54, %59 : vector<16x16x24xf32>
    %61 = vector.extract_strided_slice %41 {offsets = [3, 0], sizes = [1, 24], strides = [1, 1]} : vector<9x24xf32> to vector<1x24xf32>
    %c1_44 = arith.constant 1 : index
    %c0_45 = arith.constant 0 : index
    %c0_46 = arith.constant 0 : index
    %62 = vector.load %arg10[%c1_44, %c0_45, %c0_46] : memref<18x18x24xf32, #tpu.memory_space<vmem>>, vector<16x16x24xf32>
    %63 = vector.shape_cast %61 : vector<1x24xf32> to vector<1x1x24xf32>
    %64 = vector.broadcast %63 : vector<1x1x24xf32> to vector<16x16x24xf32>
    %65 = arith.mulf %62, %64 : vector<16x16x24xf32>
    %66 = arith.addf %60, %65 : vector<16x16x24xf32>
    %67 = vector.extract_strided_slice %41 {offsets = [4, 0], sizes = [1, 24], strides = [1, 1]} : vector<9x24xf32> to vector<1x24xf32>
    %c1_47 = arith.constant 1 : index
    %c1_48 = arith.constant 1 : index
    %c0_49 = arith.constant 0 : index
    %68 = vector.load %arg10[%c1_47, %c1_48, %c0_49] : memref<18x18x24xf32, #tpu.memory_space<vmem>>, vector<16x16x24xf32>
    %69 = vector.shape_cast %67 : vector<1x24xf32> to vector<1x1x24xf32>
    %70 = vector.broadcast %69 : vector<1x1x24xf32> to vector<16x16x24xf32>
    %71 = arith.mulf %68, %70 : vector<16x16x24xf32>
    %72 = arith.addf %66, %71 : vector<16x16x24xf32>
    %73 = vector.extract_strided_slice %41 {offsets = [5, 0], sizes = [1, 24], strides = [1, 1]} : vector<9x24xf32> to vector<1x24xf32>
    %c1_50 = arith.constant 1 : index
    %c2_51 = arith.constant 2 : index
    %c0_52 = arith.constant 0 : index
    %74 = vector.load %arg10[%c1_50, %c2_51, %c0_52] : memref<18x18x24xf32, #tpu.memory_space<vmem>>, vector<16x16x24xf32>
    %75 = vector.shape_cast %73 : vector<1x24xf32> to vector<1x1x24xf32>
    %76 = vector.broadcast %75 : vector<1x1x24xf32> to vector<16x16x24xf32>
    %77 = arith.mulf %74, %76 : vector<16x16x24xf32>
    %78 = arith.addf %72, %77 : vector<16x16x24xf32>
    %79 = vector.extract_strided_slice %41 {offsets = [6, 0], sizes = [1, 24], strides = [1, 1]} : vector<9x24xf32> to vector<1x24xf32>
    %c2_53 = arith.constant 2 : index
    %c0_54 = arith.constant 0 : index
    %c0_55 = arith.constant 0 : index
    %80 = vector.load %arg10[%c2_53, %c0_54, %c0_55] : memref<18x18x24xf32, #tpu.memory_space<vmem>>, vector<16x16x24xf32>
    %81 = vector.shape_cast %79 : vector<1x24xf32> to vector<1x1x24xf32>
    %82 = vector.broadcast %81 : vector<1x1x24xf32> to vector<16x16x24xf32>
    %83 = arith.mulf %80, %82 : vector<16x16x24xf32>
    %84 = arith.addf %78, %83 : vector<16x16x24xf32>
    %85 = vector.extract_strided_slice %41 {offsets = [7, 0], sizes = [1, 24], strides = [1, 1]} : vector<9x24xf32> to vector<1x24xf32>
    %c2_56 = arith.constant 2 : index
    %c1_57 = arith.constant 1 : index
    %c0_58 = arith.constant 0 : index
    %86 = vector.load %arg10[%c2_56, %c1_57, %c0_58] : memref<18x18x24xf32, #tpu.memory_space<vmem>>, vector<16x16x24xf32>
    %87 = vector.shape_cast %85 : vector<1x24xf32> to vector<1x1x24xf32>
    %88 = vector.broadcast %87 : vector<1x1x24xf32> to vector<16x16x24xf32>
    %89 = arith.mulf %86, %88 : vector<16x16x24xf32>
    %90 = arith.addf %84, %89 : vector<16x16x24xf32>
    %91 = vector.extract_strided_slice %41 {offsets = [8, 0], sizes = [1, 24], strides = [1, 1]} : vector<9x24xf32> to vector<1x24xf32>
    %c2_59 = arith.constant 2 : index
    %c2_60 = arith.constant 2 : index
    %c0_61 = arith.constant 0 : index
    %92 = vector.load %arg10[%c2_59, %c2_60, %c0_61] : memref<18x18x24xf32, #tpu.memory_space<vmem>>, vector<16x16x24xf32>
    %93 = vector.shape_cast %91 : vector<1x24xf32> to vector<1x1x24xf32>
    %94 = vector.broadcast %93 : vector<1x1x24xf32> to vector<16x16x24xf32>
    %95 = arith.mulf %92, %94 : vector<16x16x24xf32>
    %96 = arith.addf %90, %95 : vector<16x16x24xf32>
    %c0_62 = arith.constant 0 : index
    %c0_63 = arith.constant 0 : index
    %97 = vector.load %arg7[%c0_62, %c0_63] : memref<1x24xf32, #tpu.memory_space<vmem>>, vector<1x24xf32>
    %98 = vector.shape_cast %97 : vector<1x24xf32> to vector<1x1x24xf32>
    %99 = vector.broadcast %98 : vector<1x1x24xf32> to vector<16x16x24xf32>
    %100 = arith.addf %96, %99 : vector<16x16x24xf32>
    %101 = vector.extract_strided_slice %100 {offsets = [0, 0, 0], sizes = [16, 16, 16], strides = [1, 1, 1]} : vector<16x16x24xf32> to vector<16x16x16xf32>
    %102 = vector.shape_cast %101 : vector<16x16x16xf32> to vector<1x16x16x16xf32>
    %c0_64 = arith.constant 0 : index
    %c0_65 = arith.constant 0 : index
    %c0_66 = arith.constant 0 : index
    %c0_67 = arith.constant 0 : index
    %103 = vector.load %arg8[%c0_64, %c0_65, %c0_66, %c0_67] : memref<1x16x16x16xf32, #tpu.memory_space<vmem>>, vector<1x16x16x16xf32>
    tpu.vector_store %arg8[%c0_64, %c0_65, %c0_66, %c0_67], %102 {strides = array<i32>} : memref<1x16x16x16xf32, #tpu.memory_space<vmem>>, vector<1x16x16x16xf32>,
    %104 = vector.extract_strided_slice %100 {offsets = [0, 0, 16], sizes = [16, 16, 8], strides = [1, 1, 1]} : vector<16x16x24xf32> to vector<16x16x8xf32>
    %105 = vector.shape_cast %104 : vector<16x16x8xf32> to vector<1x16x16x8xf32>
    %c0_68 = arith.constant 0 : index
    %c0_69 = arith.constant 0 : index
    %c0_70 = arith.constant 0 : index
    %c0_71 = arith.constant 0 : index
    %106 = vector.load %arg9[%c0_68, %c0_69, %c0_70, %c0_71] : memref<1x16x16x8xf32, #tpu.memory_space<vmem>>, vector<1x16x16x8xf32>
    tpu.vector_store %arg9[%c0_68, %c0_69, %c0_70, %c0_71], %105 {strides = array<i32>} : memref<1x16x16x8xf32, #tpu.memory_space<vmem>>, vector<1x16x16x8xf32>,
    return
  }
  func.func @transform_0(%arg0: i32) -> (i32, i32, i32, i32) {
    %c0_i32 = arith.constant 0 : i32
    %c0_i32_0 = arith.constant 0 : i32
    %c0_i32_1 = arith.constant 0 : i32
    %c0_i32_2 = arith.constant 0 : i32
    return %arg0, %c0_i32, %c0_i32_0, %c0_i32_1 : i32, i32, i32, i32
  }
  func.func @transform_1(%arg0: i32) -> (i32, i32) {
    %c0_i32 = arith.constant 0 : i32
    %c0_i32_0 = arith.constant 0 : i32
    %c0_i32_1 = arith.constant 0 : i32
    return %c0_i32, %c0_i32_0 : i32, i32
  }
  func.func @transform_2(%arg0: i32) -> (i32, i32) {
    %c0_i32 = arith.constant 0 : i32
    %c0_i32_0 = arith.constant 0 : i32
    %c0_i32_1 = arith.constant 0 : i32
    return %c0_i32, %c0_i32_0 : i32, i32
  }
  func.func @transform_3(%arg0: i32) -> (i32, i32) {
    %c0_i32 = arith.constant 0 : i32
    %c0_i32_0 = arith.constant 0 : i32
    %c0_i32_1 = arith.constant 0 : i32
    return %c0_i32, %c0_i32_0 : i32, i32
  }
  func.func @transform_4(%arg0: i32) -> (i32, i32) {
    %c0_i32 = arith.constant 0 : i32
    %c0_i32_0 = arith.constant 0 : i32
    %c0_i32_1 = arith.constant 0 : i32
    return %c0_i32, %c0_i32_0 : i32, i32
  }
  func.func @transform_5(%arg0: i32) -> (i32, i32) {
    %c0_i32 = arith.constant 0 : i32
    %c0_i32_0 = arith.constant 0 : i32
    %c0_i32_1 = arith.constant 0 : i32
    return %c0_i32, %c0_i32_0 : i32, i32
  }
  func.func @transform_6(%arg0: i32) -> (i32, i32) {
    %c0_i32 = arith.constant 0 : i32
    %c0_i32_0 = arith.constant 0 : i32
    %c0_i32_1 = arith.constant 0 : i32
    return %c0_i32, %c0_i32_0 : i32, i32
  }
  func.func @transform_7(%arg0: i32) -> (i32, i32, i32, i32) {
    %c0_i32 = arith.constant 0 : i32
    %c0_i32_0 = arith.constant 0 : i32
    %c0_i32_1 = arith.constant 0 : i32
    %c0_i32_2 = arith.constant 0 : i32
    return %arg0, %c0_i32, %c0_i32_0, %c0_i32_1 : i32, i32, i32, i32
  }
  func.func @transform_8(%arg0: i32) -> (i32, i32, i32, i32) {
    %c0_i32 = arith.constant 0 : i32
    %c0_i32_0 = arith.constant 0 : i32
    %c0_i32_1 = arith.constant 0 : i32
    %c0_i32_2 = arith.constant 0 : i32
    return %arg0, %c0_i32, %c0_i32_0, %c0_i32_1 : i32, i32, i32, i32
  }
}

</mosaic_0001>

<llo_original>
// kernel: tpu_custom_call.1
$region0: #{tpu_custom_call.1}
  #allocation0 [shape = 'u32[]', space=smem, size = 0x4, offset = 0x4, fixed_abs, tag = 'smem constant byte address 0x4 - core index']
  #allocation1 [shape = 'u32[144,128]{1,0:T(1,128)}', space=vmem, size = 0x12000, scoped, tag = 'internal scratch']
  #allocation2 [shape = 'f32[18,18,24]{2,1,0:T(8,128)}', space=vmem, size = 0x36000, scoped, tag = 'scratch operand']
  %s0 = inlined_call_operand.vmem [shape: f32[2,16,16,4], index: 0, kind: input, shape index: {}]
  %s1 = inlined_call_operand.vmem [shape: f32[1,4], index: 1, kind: input, shape index: {}]
  %s2 = inlined_call_operand.vmem [shape: f32[1,4], index: 2, kind: input, shape index: {}]
  %s3 = inlined_call_operand.vmem [shape: f32[4,24], index: 3, kind: input, shape index: {}]
  %s4 = inlined_call_operand.vmem [shape: f32[1,24], index: 4, kind: input, shape index: {}]
  %s5 = inlined_call_operand.vmem [shape: f32[9,24], index: 5, kind: input, shape index: {}]
  %s6 = inlined_call_operand.vmem [shape: f32[1,24], index: 6, kind: input, shape index: {}]
  %s7 = inlined_call_operand.hbm [shape: f32[2,16,16,16], index: 7, kind: output, shape index: {0}]
  %s8 = inlined_call_operand.vmem [shape: f32[2,16,16,8], index: 8, kind: output, shape index: {1}]
  %9 = xla_tuple %s7, %s8
  %s10 = sld [smem:[#allocation0]]
  $region69: #{tpu_custom_call.1} parent=0
    _
  %s12 = ssub.s32 1, %s10
  %s13 = scalar_select 0, %s12, %s10
  $region1: #{tpu_custom_call.1} parent=0
    #allocation3 [shape = 'u8[262144]{0}', space=vmem, size = 0x40000, scoped, tag = 'output window, operand 0']
    #allocation4 [shape = 's32[2]{0}', space=sflag, size = 0x8, scoped, tag = 'scoped memory for tpu_custom_call.1']
    %14 = vsyncpa [#allocation4], 0
    %s15 = scalar_lea.sflag [#allocation4], 1
    %16 = vsyncpa %s15, 0
    loop: start=0, step=1, limit=4
    $region2: #{tpu_custom_call.1} parent=1 // loop_pre_header
      _
    $region3: #{tpu_custom_call.1} parent=1 // loop_header
      %s18 = sphi 0, %s22
      %p19 = scmp.ge.s32.totalorder %s18, 4
      %s28 = sphi 0, %s30
      %s31 = sphi 0, %s28
      %s32 = sphi 0, %s31
      %s48 = sphi 0, %s32
      %s52 = sphi 0, %s52
      %s54 = sphi 0, %s52
      %s55 = sphi 0, %s54
      %s69 = sphi 0, %s55
      %s73 = sphi 0, %s73
      %s75 = sphi 0, %s73
      %s76 = sphi 0, %s75
      %s90 = sphi 0, %s76
      %s94 = sphi 0, %s94
      %s96 = sphi 0, %s94
      %s97 = sphi 0, %s96
      %s111 = sphi 0, %s97
      %s115 = sphi 0, %s115
      %s117 = sphi 0, %s115
      %s118 = sphi 0, %s117
      %s132 = sphi 0, %s118
      %s136 = sphi 0, %s136
      %s138 = sphi 0, %s136
      %s139 = sphi 0, %s138
      %s153 = sphi 0, %s139
      %s157 = sphi 0, %s157
      %s159 = sphi 0, %s157
      %s160 = sphi 0, %s159
      %s174 = sphi 0, %s160
      %s180 = sphi 0, %s182
      %s183 = sphi 0, %s180
      %s184 = sphi 0, %s183
      %s200 = sphi 0, %s184
      %s206 = sphi 0, %s208
      %s209 = sphi 0, %s206
      %s210 = sphi 0, %s209
      %s226 = sphi 0, %s210
    $region4: #{tpu_custom_call.1} parent=1 // loop_header_branch
      %21 = sbr.rel (%p19) target = $region8
    $region5: #{tpu_custom_call.1} parent=1 // loop_body
      %s23 = ssub.s32 %s18, 1
      %s24 = ssub.s32 %s18, 2
      %s25 = sadd.s32 %s18, 1
      %s26 = ssub.s32 %s18, %s25
      %p27 = scmp.eq.s32.totalorder %s26, 0
      %s29 = sadd.s32 %s28, 1
      %s30 = scalar_select %p27, %s28, %s29
      %p33 = pneg %p27
      %p34 = scmp.eq.s32.totalorder %s18, 1
      %p35 = por %p33, %p34
      %p36 = scmp.ne.s32.totalorder %s28, %s31
      %p37 = scmp.eq.s32.totalorder %s18, 0
      %p38 = por %p36, %p37
      %p39 = scmp.ne.s32.totalorder %s28, %s31
      %p40 = scmp.eq.s32.totalorder %s23, 1
      %p41 = por %p39, %p40
      %p42 = scmp.ne.s32.totalorder %s31, %s32
      %p43 = scmp.eq.s32.totalorder %s23, 0
      %p44 = por %p42, %p43
      %p45 = scmp.ne.s32.totalorder %s31, %s32
      %p46 = scmp.eq.s32.totalorder %s24, 1
      %p47 = por %p45, %p46
      %p49 = scmp.ne.s32.totalorder %s32, %s48
      %p50 = scmp.eq.s32.totalorder %s24, 0
      %p51 = por %p49, %p50
      %s53 = sadd.s32 %s52, 1
      %p56 = scmp.eq.s32.totalorder %s18, 1
      %p57 = scmp.ne.s32.totalorder %s52, %s54
      %p58 = scmp.eq.s32.totalorder %s18, 0
      %p59 = por %p57, %p58
      %p60 = scmp.ne.s32.totalorder %s52, %s54
      %p61 = scmp.eq.s32.totalorder %s23, 1
      %p62 = por %p60, %p61
      %p63 = scmp.ne.s32.totalorder %s54, %s55
      %p64 = scmp.eq.s32.totalorder %s23, 0
      %p65 = por %p63, %p64
      %p66 = scmp.ne.s32.totalorder %s54, %s55
      %p67 = scmp.eq.s32.totalorder %s24, 1
      %p68 = por %p66, %p67
      %p70 = scmp.ne.s32.totalorder %s55, %s69
      %p71 = scmp.eq.s32.totalorder %s24, 0
      %p72 = por %p70, %p71
      %s74 = sadd.s32 %s73, 1
      %p77 = scmp.eq.s32.totalorder %s18, 1
      %p78 = scmp.ne.s32.totalorder %s73, %s75
      %p79 = scmp.eq.s32.totalorder %s18, 0
      %p80 = por %p78, %p79
      %p81 = scmp.ne.s32.totalorder %s73, %s75
      %p82 = scmp.eq.s32.totalorder %s23, 1
      %p83 = por %p81, %p82
      %p84 = scmp.ne.s32.totalorder %s75, %s76
      %p85 = scmp.eq.s32.totalorder %s23, 0
      %p86 = por %p84, %p85
      %p87 = scmp.ne.s32.totalorder %s75, %s76
      %p88 = scmp.eq.s32.totalorder %s24, 1
      %p89 = por %p87, %p88
      %p91 = scmp.ne.s32.totalorder %s76, %s90
      %p92 = scmp.eq.s32.totalorder %s24, 0
      %p93 = por %p91, %p92
      %s95 = sadd.s32 %s94, 1
      %p98 = scmp.eq.s32.totalorder %s18, 1
      %p99 = scmp.ne.s32.totalorder %s94, %s96
      %p100 = scmp.eq.s32.totalorder %s18, 0
      %p101 = por %p99, %p100
      %p102 = scmp.ne.s32.totalorder %s94, %s96
      %p103 = scmp.eq.s32.totalorder %s23, 1
      %p104 = por %p102, %p103
      %p105 = scmp.ne.s32.totalorder %s96, %s97
      %p106 = scmp.eq.s32.totalorder %s23, 0
      %p107 = por %p105, %p106
      %p108 = scmp.ne.s32.totalorder %s96, %s97
      %p109 = scmp.eq.s32.totalorder %s24, 1
      %p110 = por %p108, %p109
      %p112 = scmp.ne.s32.totalorder %s97, %s111
      %p113 = scmp.eq.s32.totalorder %s24, 0
      %p114 = por %p112, %p113
      %s116 = sadd.s32 %s115, 1
      %p119 = scmp.eq.s32.totalorder %s18, 1
      %p120 = scmp.ne.s32.totalorder %s115, %s117
      %p121 = scmp.eq.s32.totalorder %s18, 0
      %p122 = por %p120, %p121
      %p123 = scmp.ne.s32.totalorder %s115, %s117
      %p124 = scmp.eq.s32.totalorder %s23, 1
      %p125 = por %p123, %p124
      %p126 = scmp.ne.s32.totalorder %s117, %s118
      %p127 = scmp.eq.s32.totalorder %s23, 0
      %p128 = por %p126, %p127
      %p129 = scmp.ne.s32.totalorder %s117, %s118
      %p130 = scmp.eq.s32.totalorder %s24, 1
      %p131 = por %p129, %p130
      %p133 = scmp.ne.s32.totalorder %s118, %s132
      %p134 = scmp.eq.s32.totalorder %s24, 0
      %p135 = por %p133, %p134
      %s137 = sadd.s32 %s136, 1
      %p140 = scmp.eq.s32.totalorder %s18, 1
      %p141 = scmp.ne.s32.totalorder %s136, %s138
      %p142 = scmp.eq.s32.totalorder %s18, 0
      %p143 = por %p141, %p142
      %p144 = scmp.ne.s32.totalorder %s136, %s138
      %p145 = scmp.eq.s32.totalorder %s23, 1
      %p146 = por %p144, %p145
      %p147 = scmp.ne.s32.totalorder %s138, %s139
      %p148 = scmp.eq.s32.totalorder %s23, 0
      %p149 = por %p147, %p148
      %p150 = scmp.ne.s32.totalorder %s138, %s139
      %p151 = scmp.eq.s32.totalorder %s24, 1
      %p152 = por %p150, %p151
      %p154 = scmp.ne.s32.totalorder %s139, %s153
      %p155 = scmp.eq.s32.totalorder %s24, 0
      %p156 = por %p154, %p155
      %s158 = sadd.s32 %s157, 1
      %p161 = scmp.eq.s32.totalorder %s18, 1
      %p162 = scmp.ne.s32.totalorder %s157, %s159
      %p163 = scmp.eq.s32.totalorder %s18, 0
      %p164 = por %p162, %p163
      %p165 = scmp.ne.s32.totalorder %s157, %s159
      %p166 = scmp.eq.s32.totalorder %s23, 1
      %p167 = por %p165, %p166
      %p168 = scmp.ne.s32.totalorder %s159, %s160
      %p169 = scmp.eq.s32.totalorder %s23, 0
      %p170 = por %p168, %p169
      %p171 = scmp.ne.s32.totalorder %s159, %s160
      %p172 = scmp.eq.s32.totalorder %s24, 1
      %p173 = por %p171, %p172
      %p175 = scmp.ne.s32.totalorder %s160, %s174
      %p176 = scmp.eq.s32.totalorder %s24, 0
      %p177 = por %p175, %p176
      %s178 = ssub.s32 %s18, %s25
      %p179 = scmp.eq.s32.totalorder %s178, 0
      %s181 = sadd.s32 %s180, 1
      %s182 = scalar_select %p179, %s180, %s181
      %p185 = pneg %p179
      %p186 = scmp.eq.s32.totalorder %s18, 1
      %p187 = por %p185, %p186
      %p188 = scmp.ne.s32.totalorder %s180, %s183
      %p189 = scmp.eq.s32.totalorder %s18, 0
      %p190 = por %p188, %p189
      %p191 = scmp.ne.s32.totalorder %s180, %s183
      %p192 = scmp.eq.s32.totalorder %s23, 1
      %p193 = por %p191, %p192
      %p194 = scmp.ne.s32.totalorder %s183, %s184
      %p195 = scmp.eq.s32.totalorder %s23, 0
      %p196 = por %p194, %p195
      %p197 = scmp.ne.s32.totalorder %s183, %s184
      %p198 = scmp.eq.s32.totalorder %s24, 1
      %p199 = por %p197, %p198
      %p201 = scmp.ne.s32.totalorder %s184, %s200
      %p202 = scmp.eq.s32.totalorder %s24, 0
      %p203 = por %p201, %p202
      %s204 = ssub.s32 %s18, %s25
      %p205 = scmp.eq.s32.totalorder %s204, 0
      %s207 = sadd.s32 %s206, 1
      %s208 = scalar_select %p205, %s206, %s207
      %p211 = pneg %p205
      %p212 = scmp.eq.s32.totalorder %s18, 1
      %p213 = por %p211, %p212
      %p214 = scmp.ne.s32.totalorder %s206, %s209
      %p215 = scmp.eq.s32.totalorder %s18, 0
      %p216 = por %p214, %p215
      %p217 = scmp.ne.s32.totalorder %s206, %s209
      %p218 = scmp.eq.s32.totalorder %s23, 1
      %p219 = por %p217, %p218
      %p220 = scmp.ne.s32.totalorder %s209, %s210
      %p221 = scmp.eq.s32.totalorder %s23, 0
      %p222 = por %p220, %p221
      %p223 = scmp.ne.s32.totalorder %s209, %s210
      %p224 = scmp.eq.s32.totalorder %s24, 1
      %p225 = por %p223, %p224
      %p227 = scmp.ne.s32.totalorder %s210, %s226
      %p228 = scmp.eq.s32.totalorder %s24, 0
      %p229 = por %p227, %p228
      %p230 = scmp.le.s32.totalorder 1, %s18
      %p231 = scmp.lt.s32.totalorder %s18, 3
      %p232 = pnand %p230, %p231
      %p233 = pneg %p232
      // Predicated region
      $region9: #{tpu_custom_call.1} parent=5 // pred_check
        _
      $region10: #{tpu_custom_call.1} parent=5 // pred_check_branch
        %235 = sbr.rel (%p232) target = $region12
      $region11: #{tpu_custom_call.1} parent=5 // pred_region
        %s236 = ssub.s32 %s18, 1
        // Predicated region
        $region13: #{tpu_custom_call.1} parent=11 // pred_check
          %p237 = pneg %p65
        $region14: #{tpu_custom_call.1} parent=11 // pred_check_branch
          %239 = sbr.rel (%p237) target = $region16
        $region15: #{tpu_custom_call.1} parent=11 // pred_region
          _
        $region16: #{tpu_custom_call.1} parent=11 // pred_fallthru
          _
        // Predicated region
        $region17: #{tpu_custom_call.1} parent=11 // pred_check
          %p240 = pneg %p86
        $region18: #{tpu_custom_call.1} parent=11 // pred_check_branch
          %242 = sbr.rel (%p240) target = $region20
        $region19: #{tpu_custom_call.1} parent=11 // pred_region
          _
        $region20: #{tpu_custom_call.1} parent=11 // pred_fallthru
          _
        // Predicated region
        $region21: #{tpu_custom_call.1} parent=11 // pred_check
          %p243 = pneg %p107
        $region22: #{tpu_custom_call.1} parent=11 // pred_check_branch
          %245 = sbr.rel (%p243) target = $region24
        $region23: #{tpu_custom_call.1} parent=11 // pred_region
          _
        $region24: #{tpu_custom_call.1} parent=11 // pred_fallthru
          _
        // Predicated region
        $region25: #{tpu_custom_call.1} parent=11 // pred_check
          %p246 = pneg %p128
        $region26: #{tpu_custom_call.1} parent=11 // pred_check_branch
          %248 = sbr.rel (%p246) target = $region28
        $region27: #{tpu_custom_call.1} parent=11 // pred_region
          _
        $region28: #{tpu_custom_call.1} parent=11 // pred_fallthru
          _
        // Predicated region
        $region29: #{tpu_custom_call.1} parent=11 // pred_check
          %p249 = pneg %p149
        $region30: #{tpu_custom_call.1} parent=11 // pred_check_branch
          %251 = sbr.rel (%p249) target = $region32
        $region31: #{tpu_custom_call.1} parent=11 // pred_region
          _
        $region32: #{tpu_custom_call.1} parent=11 // pred_fallthru
          _
        // Predicated region
        $region33: #{tpu_custom_call.1} parent=11 // pred_check
          %p252 = pneg %p170
        $region34: #{tpu_custom_call.1} parent=11 // pred_check_branch
          %254 = sbr.rel (%p252) target = $region36
        $region35: #{tpu_custom_call.1} parent=11 // pred_region
          _
        $region36: #{tpu_custom_call.1} parent=11 // pred_fallthru
          _
      $region12: #{tpu_custom_call.1} parent=5 // pred_fallthru
        _
      %p255 = scmp.lt.s32.totalorder %s18, 2
      // Predicated region
      $region37: #{tpu_custom_call.1} parent=5 // pred_check
        %p256 = pneg %p255
      $region38: #{tpu_custom_call.1} parent=5 // pred_check_branch
        %258 = sbr.rel (%p256) target = $region40
      $region39: #{tpu_custom_call.1} parent=5 // pred_region
        // Predicated region
        $region41: #{tpu_custom_call.1} parent=39 // pred_check
          %p259 = pneg %p38
        $region42: #{tpu_custom_call.1} parent=39 // pred_check_branch
          %261 = sbr.rel (%p259) target = $region44
        $region43: #{tpu_custom_call.1} parent=39 // pred_region
          %p262 = scmp.lt.s32.totalorder %s18, 1
          %s263 = scalar_select %p262, %s18, 1
          %s264 = smul.addr %s263, 32
          %s265 = smul.addr %s264, 8
          %s266 = scalar_lea.vmem %s0, %s265
        $region44: #{tpu_custom_call.1} parent=39 // pred_fallthru
          _
      $region40: #{tpu_custom_call.1} parent=5 // pred_fallthru
        _
      %p267 = scmp.le.s32.totalorder 1, %s18
      %p268 = scmp.lt.s32.totalorder %s18, 3
      %p269 = pnand %p267, %p268
      %p270 = pneg %p269
      // Predicated region
      $region45: #{tpu_custom_call.1} parent=5 // pred_check
        _
      $region46: #{tpu_custom_call.1} parent=5 // pred_check_branch
        %272 = sbr.rel (%p269) target = $region48
      $region47: #{tpu_custom_call.1} parent=5 // pred_region
        %s273 = ssub.s32 %s18, 1
        %p274 = scmp.lt.s32.totalorder %s23, 1
        %s275 = scalar_select %p274, %s23, 1
        %s276 = smul.addr %s275, 32
        %s277 = smul.addr %s276, 8
        %s278 = scalar_lea.vmem %s0, %s277
        %p279 = pneg %p44
        %p280 = pneg %p41
        %p281 = pneg %p65
        %p282 = pneg %p62
        %p283 = pneg %p86
        %p284 = pneg %p83
        %p285 = pneg %p107
        %p286 = pneg %p104
        %p287 = pneg %p128
        %p288 = pneg %p125
        %p289 = pneg %p149
        %p290 = pneg %p146
        %p291 = pneg %p170
        %p292 = pneg %p167
        %p293 = pneg %p196
        %p294 = pneg %p193
        %s295 = sand.u32 %s183, 1
        %s296 = scalar_lea.sflag [#allocation4], %s295
        %s297 = sand.u32 %s183, 1
        %s298 = smul.addr %s297, 256
        %s299 = scalar_lea.vmem [#allocation3], %s298
        %p300 = pneg %p222
        %p301 = pneg %p219
        %p302 = scmp.lt.s32.totalorder %s23, 1
        %s303 = scalar_select %p302, %s23, 1
        %s304 = smul.addr %s303, 32
        %s305 = smul.addr %s304, 8
        %s306 = scalar_lea.vmem %s8, %s305
        %p307 = scmp.lt.s32.totalorder %s23, 1
        %s308 = scalar_select %p307, %s23, 1
        %s309 = smul.addr %s308, 32
        %s310 = smul.addr %s309, 8
        %s311 = scalar_lea.vmem %s0, %s310
        %p312 = scmp.lt.s32.totalorder %s23, 1
        %s313 = scalar_select %p312, %s23, 1
        %s314 = smul.addr %s313, 32
        %s315 = smul.addr %s314, 8
        %s316 = scalar_lea.vmem %s8, %s315
        %v317 = vld [vmem:[%s311] sm:$0xff]
        %v318 = vld [vmem:[%s311 + $0x8] sm:$0xff]
        %v319 = vld [vmem:[%s311 + $0x10] sm:$0xff]
        %v320 = vld [vmem:[%s311 + $0x18] sm:$0xff]
        %v321 = vld [vmem:[%s311 + $0x20] sm:$0xff]
        %v322 = vld [vmem:[%s311 + $0x28] sm:$0xff]
        %v323 = vld [vmem:[%s311 + $0x30] sm:$0xff]
        %v324 = vld [vmem:[%s311 + $0x38] sm:$0xff]
        %v325 = vld [vmem:[%s311 + $0x40] sm:$0xff]
        %v326 = vld [vmem:[%s311 + $0x48] sm:$0xff]
        %v327 = vld [vmem:[%s311 + $0x50] sm:$0xff]
        %v328 = vld [vmem:[%s311 + $0x58] sm:$0xff]
        %v329 = vld [vmem:[%s311 + $0x60] sm:$0xff]
        %v330 = vld [vmem:[%s311 + $0x68] sm:$0xff]
        %v331 = vld [vmem:[%s311 + $0x70] sm:$0xff]
        %v332 = vld [vmem:[%s311 + $0x78] sm:$0xff]
        %v333 = vld [vmem:[%s311 + $0x80] sm:$0xff]
        %v334 = vld [vmem:[%s311 + $0x88] sm:$0xff]
        %v335 = vld [vmem:[%s311 + $0x90] sm:$0xff]
        %v336 = vld [vmem:[%s311 + $0x98] sm:$0xff]
        %v337 = vld [vmem:[%s311 + $0xa0] sm:$0xff]
        %v338 = vld [vmem:[%s311 + $0xa8] sm:$0xff]
        %v339 = vld [vmem:[%s311 + $0xb0] sm:$0xff]
        %v340 = vld [vmem:[%s311 + $0xb8] sm:$0xff]
        %v341 = vld [vmem:[%s311 + $0xc0] sm:$0xff]
        %v342 = vld [vmem:[%s311 + $0xc8] sm:$0xff]
        %v343 = vld [vmem:[%s311 + $0xd0] sm:$0xff]
        %v344 = vld [vmem:[%s311 + $0xd8] sm:$0xff]
        %v345 = vld [vmem:[%s311 + $0xe0] sm:$0xff]
        %v346 = vld [vmem:[%s311 + $0xe8] sm:$0xff]
        %v347 = vld [vmem:[%s311 + $0xf0] sm:$0xff]
        %v348 = vld [vmem:[%s311 + $0xf8] sm:$0xff]
        %vm349 = vcmask 31744
        %v350 = vsel %vm349, %v317, 0.0
        %351 = vadd.xlane.f32.xlu0 %v350
        %v352 = vpop.xlane.xlu0 %351
        %v353 = vsel %vm349, %v318, 0.0
        %354 = vadd.xlane.f32.xlu0 %v353
        %v355 = vpop.xlane.xlu0 %354
        %v356 = vsel %vm349, %v319, 0.0
        %357 = vadd.xlane.f32.xlu0 %v356
        %v358 = vpop.xlane.xlu0 %357
        %v359 = vsel %vm349, %v320, 0.0
        %360 = vadd.xlane.f32.xlu0 %v359
        %v361 = vpop.xlane.xlu0 %360
        %v362 = vsel %vm349, %v321, 0.0
        %363 = vadd.xlane.f32.xlu0 %v362
        %v364 = vpop.xlane.xlu0 %363
        %v365 = vsel %vm349, %v322, 0.0
        %366 = vadd.xlane.f32.xlu0 %v365
        %v367 = vpop.xlane.xlu0 %366
        %v368 = vsel %vm349, %v323, 0.0
        %369 = vadd.xlane.f32.xlu0 %v368
        %v370 = vpop.xlane.xlu0 %369
        %v371 = vsel %vm349, %v324, 0.0
        %372 = vadd.xlane.f32.xlu0 %v371
        %v373 = vpop.xlane.xlu0 %372
        %v374 = vsel %vm349, %v325, 0.0
        %375 = vadd.xlane.f32.xlu0 %v374
        %v376 = vpop.xlane.xlu0 %375
        %v377 = vsel %vm349, %v326, 0.0
        %378 = vadd.xlane.f32.xlu0 %v377
        %v379 = vpop.xlane.xlu0 %378
        %v380 = vsel %vm349, %v327, 0.0
        %381 = vadd.xlane.f32.xlu0 %v380
        %v382 = vpop.xlane.xlu0 %381
        %v383 = vsel %vm349, %v328, 0.0
        %384 = vadd.xlane.f32.xlu0 %v383
        %v385 = vpop.xlane.xlu0 %384
        %v386 = vsel %vm349, %v329, 0.0
        %387 = vadd.xlane.f32.xlu0 %v386
        %v388 = vpop.xlane.xlu0 %387
        %v389 = vsel %vm349, %v330, 0.0
        %390 = vadd.xlane.f32.xlu0 %v389
        %v391 = vpop.xlane.xlu0 %390
        %v392 = vsel %vm349, %v331, 0.0
        %393 = vadd.xlane.f32.xlu0 %v392
        %v394 = vpop.xlane.xlu0 %393
        %v395 = vsel %vm349, %v332, 0.0
        %396 = vadd.xlane.f32.xlu0 %v395
        %v397 = vpop.xlane.xlu0 %396
        %v398 = vsel %vm349, %v333, 0.0
        %399 = vadd.xlane.f32.xlu0 %v398
        %v400 = vpop.xlane.xlu0 %399
        %v401 = vsel %vm349, %v334, 0.0
        %402 = vadd.xlane.f32.xlu0 %v401
        %v403 = vpop.xlane.xlu0 %402
        %v404 = vsel %vm349, %v335, 0.0
        %405 = vadd.xlane.f32.xlu0 %v404
        %v406 = vpop.xlane.xlu0 %405
        %v407 = vsel %vm349, %v336, 0.0
        %408 = vadd.xlane.f32.xlu0 %v407
        %v409 = vpop.xlane.xlu0 %408
        %v410 = vsel %vm349, %v337, 0.0
        %411 = vadd.xlane.f32.xlu0 %v410
        %v412 = vpop.xlane.xlu0 %411
        %v413 = vsel %vm349, %v338, 0.0
        %414 = vadd.xlane.f32.xlu0 %v413
        %v415 = vpop.xlane.xlu0 %414
        %v416 = vsel %vm349, %v339, 0.0
        %417 = vadd.xlane.f32.xlu0 %v416
        %v418 = vpop.xlane.xlu0 %417
        %v419 = vsel %vm349, %v340, 0.0
        %420 = vadd.xlane.f32.xlu0 %v419
        %v421 = vpop.xlane.xlu0 %420
        %v422 = vsel %vm349, %v341, 0.0
        %423 = vadd.xlane.f32.xlu0 %v422
        %v424 = vpop.xlane.xlu0 %423
        %v425 = vsel %vm349, %v342, 0.0
        %426 = vadd.xlane.f32.xlu0 %v425
        %v427 = vpop.xlane.xlu0 %426
        %v428 = vsel %vm349, %v343, 0.0
        %429 = vadd.xlane.f32.xlu0 %v428
        %v430 = vpop.xlane.xlu0 %429
        %v431 = vsel %vm349, %v344, 0.0
        %432 = vadd.xlane.f32.xlu0 %v431
        %v433 = vpop.xlane.xlu0 %432
        %v434 = vsel %vm349, %v345, 0.0
        %435 = vadd.xlane.f32.xlu0 %v434
        %v436 = vpop.xlane.xlu0 %435
        %v437 = vsel %vm349, %v346, 0.0
        %438 = vadd.xlane.f32.xlu0 %v437
        %v439 = vpop.xlane.xlu0 %438
        %v440 = vsel %vm349, %v347, 0.0
        %441 = vadd.xlane.f32.xlu0 %v440
        %v442 = vpop.xlane.xlu0 %441
        %v443 = vsel %vm349, %v348, 0.0
        %444 = vadd.xlane.f32.xlu0 %v443
        %v445 = vpop.xlane.xlu0 %444
        %v446 = vrcp.pop 4.0
        %v447 = vmul.f32 %v352, %v446
        %v448 = vmul.f32 %v355, %v446
        %v449 = vmul.f32 %v358, %v446
        %v450 = vmul.f32 %v361, %v446
        %v451 = vmul.f32 %v364, %v446
        %v452 = vmul.f32 %v367, %v446
        %v453 = vmul.f32 %v370, %v446
        %v454 = vmul.f32 %v373, %v446
        %v455 = vmul.f32 %v376, %v446
        %v456 = vmul.f32 %v379, %v446
        %v457 = vmul.f32 %v382, %v446
        %v458 = vmul.f32 %v385, %v446
        %v459 = vmul.f32 %v388, %v446
        %v460 = vmul.f32 %v391, %v446
        %v461 = vmul.f32 %v394, %v446
        %v462 = vmul.f32 %v397, %v446
        %v463 = vmul.f32 %v400, %v446
        %v464 = vmul.f32 %v403, %v446
        %v465 = vmul.f32 %v406, %v446
        %v466 = vmul.f32 %v409, %v446
        %v467 = vmul.f32 %v412, %v446
        %v468 = vmul.f32 %v415, %v446
        %v469 = vmul.f32 %v418, %v446
        %v470 = vmul.f32 %v421, %v446
        %v471 = vmul.f32 %v424, %v446
        %v472 = vmul.f32 %v427, %v446
        %v473 = vmul.f32 %v430, %v446
        %v474 = vmul.f32 %v433, %v446
        %v475 = vmul.f32 %v436, %v446
        %v476 = vmul.f32 %v439, %v446
        %v477 = vmul.f32 %v442, %v446
        %v478 = vmul.f32 %v445, %v446
        %v479 = vsub.f32 %v317, %v447
        %v480 = vsub.f32 %v318, %v448
        %v481 = vsub.f32 %v319, %v449
        %v482 = vsub.f32 %v320, %v450
        %v483 = vsub.f32 %v321, %v451
        %v484 = vsub.f32 %v322, %v452
        %v485 = vsub.f32 %v323, %v453
        %v486 = vsub.f32 %v324, %v454
        %v487 = vsub.f32 %v325, %v455
        %v488 = vsub.f32 %v326, %v456
        %v489 = vsub.f32 %v327, %v457
        %v490 = vsub.f32 %v328, %v458
        %v491 = vsub.f32 %v329, %v459
        %v492 = vsub.f32 %v330, %v460
        %v493 = vsub.f32 %v331, %v461
        %v494 = vsub.f32 %v332, %v462
        %v495 = vsub.f32 %v333, %v463
        %v496 = vsub.f32 %v334, %v464
        %v497 = vsub.f32 %v335, %v465
        %v498 = vsub.f32 %v336, %v466
        %v499 = vsub.f32 %v337, %v467
        %v500 = vsub.f32 %v338, %v468
        %v501 = vsub.f32 %v339, %v469
        %v502 = vsub.f32 %v340, %v470
        %v503 = vsub.f32 %v341, %v471
        %v504 = vsub.f32 %v342, %v472
        %v505 = vsub.f32 %v343, %v473
        %v506 = vsub.f32 %v344, %v474
        %v507 = vsub.f32 %v345, %v475
        %v508 = vsub.f32 %v346, %v476
        %v509 = vsub.f32 %v347, %v477
        %v510 = vsub.f32 %v348, %v478
        %v511 = vmul.f32 %v479, %v479
        %v512 = vmul.f32 %v480, %v480
        %v513 = vmul.f32 %v481, %v481
        %v514 = vmul.f32 %v482, %v482
        %v515 = vmul.f32 %v483, %v483
        %v516 = vmul.f32 %v484, %v484
        %v517 = vmul.f32 %v485, %v485
        %v518 = vmul.f32 %v486, %v486
        %v519 = vmul.f32 %v487, %v487
        %v520 = vmul.f32 %v488, %v488
        %v521 = vmul.f32 %v489, %v489
        %v522 = vmul.f32 %v490, %v490
        %v523 = vmul.f32 %v491, %v491
        %v524 = vmul.f32 %v492, %v492
        %v525 = vmul.f32 %v493, %v493
        %v526 = vmul.f32 %v494, %v494
        %v527 = vmul.f32 %v495, %v495
        %v528 = vmul.f32 %v496, %v496
        %v529 = vmul.f32 %v497, %v497
        %v530 = vmul.f32 %v498, %v498
        %v531 = vmul.f32 %v499, %v499
        %v532 = vmul.f32 %v500, %v500
        %v533 = vmul.f32 %v501, %v501
        %v534 = vmul.f32 %v502, %v502
        %v535 = vmul.f32 %v503, %v503
        %v536 = vmul.f32 %v504, %v504
        %v537 = vmul.f32 %v505, %v505
        %v538 = vmul.f32 %v506, %v506
        %v539 = vmul.f32 %v507, %v507
        %v540 = vmul.f32 %v508, %v508
        %v541 = vmul.f32 %v509, %v509
        %v542 = vmul.f32 %v510, %v510
        %v543 = vsel %vm349, %v511, 0.0
        %544 = vadd.xlane.f32.xlu0 %v543
        %v545 = vpop.xlane.xlu0 %544
        %v546 = vsel %vm349, %v512, 0.0
        %547 = vadd.xlane.f32.xlu0 %v546
        %v548 = vpop.xlane.xlu0 %547
        %v549 = vsel %vm349, %v513, 0.0
        %550 = vadd.xlane.f32.xlu0 %v549
        %v551 = vpop.xlane.xlu0 %550
        %v552 = vsel %vm349, %v514, 0.0
        %553 = vadd.xlane.f32.xlu0 %v552
        %v554 = vpop.xlane.xlu0 %553
        %v555 = vsel %vm349, %v515, 0.0
        %556 = vadd.xlane.f32.xlu0 %v555
        %v557 = vpop.xlane.xlu0 %556
        %v558 = vsel %vm349, %v516, 0.0
        %559 = vadd.xlane.f32.xlu0 %v558
        %v560 = vpop.xlane.xlu0 %559
        %v561 = vsel %vm349, %v517, 0.0
        %562 = vadd.xlane.f32.xlu0 %v561
        %v563 = vpop.xlane.xlu0 %562
        %v564 = vsel %vm349, %v518, 0.0
        %565 = vadd.xlane.f32.xlu0 %v564
        %v566 = vpop.xlane.xlu0 %565
        %v567 = vsel %vm349, %v519, 0.0
        %568 = vadd.xlane.f32.xlu0 %v567
        %v569 = vpop.xlane.xlu0 %568
        %v570 = vsel %vm349, %v520, 0.0
        %571 = vadd.xlane.f32.xlu0 %v570
        %v572 = vpop.xlane.xlu0 %571
        %v573 = vsel %vm349, %v521, 0.0
        %574 = vadd.xlane.f32.xlu0 %v573
        %v575 = vpop.xlane.xlu0 %574
        %v576 = vsel %vm349, %v522, 0.0
        %577 = vadd.xlane.f32.xlu0 %v576
        %v578 = vpop.xlane.xlu0 %577
        %v579 = vsel %vm349, %v523, 0.0
        %580 = vadd.xlane.f32.xlu0 %v579
        %v581 = vpop.xlane.xlu0 %580
        %v582 = vsel %vm349, %v524, 0.0
        %583 = vadd.xlane.f32.xlu0 %v582
        %v584 = vpop.xlane.xlu0 %583
        %v585 = vsel %vm349, %v525, 0.0
        %586 = vadd.xlane.f32.xlu0 %v585
        %v587 = vpop.xlane.xlu0 %586
        %v588 = vsel %vm349, %v526, 0.0
        %589 = vadd.xlane.f32.xlu0 %v588
        %v590 = vpop.xlane.xlu0 %589
        %v591 = vsel %vm349, %v527, 0.0
        %592 = vadd.xlane.f32.xlu0 %v591
        %v593 = vpop.xlane.xlu0 %592
        %v594 = vsel %vm349, %v528, 0.0
        %595 = vadd.xlane.f32.xlu0 %v594
        %v596 = vpop.xlane.xlu0 %595
        %v597 = vsel %vm349, %v529, 0.0
        %598 = vadd.xlane.f32.xlu0 %v597
        %v599 = vpop.xlane.xlu0 %598
        %v600 = vsel %vm349, %v530, 0.0
        %601 = vadd.xlane.f32.xlu0 %v600
        %v602 = vpop.xlane.xlu0 %601
        %v603 = vsel %vm349, %v531, 0.0
        %604 = vadd.xlane.f32.xlu0 %v603
        %v605 = vpop.xlane.xlu0 %604
        %v606 = vsel %vm349, %v532, 0.0
        %607 = vadd.xlane.f32.xlu0 %v606
        %v608 = vpop.xlane.xlu0 %607
        %v609 = vsel %vm349, %v533, 0.0
        %610 = vadd.xlane.f32.xlu0 %v609
        %v611 = vpop.xlane.xlu0 %610
        %v612 = vsel %vm349, %v534, 0.0
        %613 = vadd.xlane.f32.xlu0 %v612
        %v614 = vpop.xlane.xlu0 %613
        %v615 = vsel %vm349, %v535, 0.0
        %616 = vadd.xlane.f32.xlu0 %v615
        %v617 = vpop.xlane.xlu0 %616
        %v618 = vsel %vm349, %v536, 0.0
        %619 = vadd.xlane.f32.xlu0 %v618
        %v620 = vpop.xlane.xlu0 %619
        %v621 = vsel %vm349, %v537, 0.0
        %622 = vadd.xlane.f32.xlu0 %v621
        %v623 = vpop.xlane.xlu0 %622
        %v624 = vsel %vm349, %v538, 0.0
        %625 = vadd.xlane.f32.xlu0 %v624
        %v626 = vpop.xlane.xlu0 %625
        %v627 = vsel %vm349, %v539, 0.0
        %628 = vadd.xlane.f32.xlu0 %v627
        %v629 = vpop.xlane.xlu0 %628
        %v630 = vsel %vm349, %v540, 0.0
        %631 = vadd.xlane.f32.xlu0 %v630
        %v632 = vpop.xlane.xlu0 %631
        %v633 = vsel %vm349, %v541, 0.0
        %634 = vadd.xlane.f32.xlu0 %v633
        %v635 = vpop.xlane.xlu0 %634
        %v636 = vsel %vm349, %v542, 0.0
        %637 = vadd.xlane.f32.xlu0 %v636
        %v638 = vpop.xlane.xlu0 %637
        %v639 = vmul.f32 %v545, %v446
        %v640 = vmul.f32 %v548, %v446
        %v641 = vmul.f32 %v551, %v446
        %v642 = vmul.f32 %v554, %v446
        %v643 = vmul.f32 %v557, %v446
        %v644 = vmul.f32 %v560, %v446
        %v645 = vmul.f32 %v563, %v446
        %v646 = vmul.f32 %v566, %v446
        %v647 = vmul.f32 %v569, %v446
        %v648 = vmul.f32 %v572, %v446
        %v649 = vmul.f32 %v575, %v446
        %v650 = vmul.f32 %v578, %v446
        %v651 = vmul.f32 %v581, %v446
        %v652 = vmul.f32 %v584, %v446
        %v653 = vmul.f32 %v587, %v446
        %v654 = vmul.f32 %v590, %v446
        %v655 = vmul.f32 %v593, %v446
        %v656 = vmul.f32 %v596, %v446
        %v657 = vmul.f32 %v599, %v446
        %v658 = vmul.f32 %v602, %v446
        %v659 = vmul.f32 %v605, %v446
        %v660 = vmul.f32 %v608, %v446
        %v661 = vmul.f32 %v611, %v446
        %v662 = vmul.f32 %v614, %v446
        %v663 = vmul.f32 %v617, %v446
        %v664 = vmul.f32 %v620, %v446
        %v665 = vmul.f32 %v623, %v446
        %v666 = vmul.f32 %v626, %v446
        %v667 = vmul.f32 %v629, %v446
        %v668 = vmul.f32 %v632, %v446
        %v669 = vmul.f32 %v635, %v446
        %v670 = vmul.f32 %v638, %v446
        %v671 = vadd.f32 %v639, 1e-05
        %v672 = vadd.f32 %v640, 1e-05
        %v673 = vadd.f32 %v641, 1e-05
        %v674 = vadd.f32 %v642, 1e-05
        %v675 = vadd.f32 %v643, 1e-05
        %v676 = vadd.f32 %v644, 1e-05
        %v677 = vadd.f32 %v645, 1e-05
        %v678 = vadd.f32 %v646, 1e-05
        %v679 = vadd.f32 %v647, 1e-05
        %v680 = vadd.f32 %v648, 1e-05
        %v681 = vadd.f32 %v649, 1e-05
        %v682 = vadd.f32 %v650, 1e-05
        %v683 = vadd.f32 %v651, 1e-05
        %v684 = vadd.f32 %v652, 1e-05
        %v685 = vadd.f32 %v653, 1e-05
        %v686 = vadd.f32 %v654, 1e-05
        %v687 = vadd.f32 %v655, 1e-05
        %v688 = vadd.f32 %v656, 1e-05
        %v689 = vadd.f32 %v657, 1e-05
        %v690 = vadd.f32 %v658, 1e-05
        %v691 = vadd.f32 %v659, 1e-05
        %v692 = vadd.f32 %v660, 1e-05
        %v693 = vadd.f32 %v661, 1e-05
        %v694 = vadd.f32 %v662, 1e-05
        %v695 = vadd.f32 %v663, 1e-05
        %v696 = vadd.f32 %v664, 1e-05
        %v697 = vadd.f32 %v665, 1e-05
        %v698 = vadd.f32 %v666, 1e-05
        %v699 = vadd.f32 %v667, 1e-05
        %v700 = vadd.f32 %v668, 1e-05
        %v701 = vadd.f32 %v669, 1e-05
        %v702 = vadd.f32 %v670, 1e-05
        %v703 = vrsqrt.pop %v671
        %v704 = vrsqrt.pop %v672
        %v705 = vrsqrt.pop %v673
        %v706 = vrsqrt.pop %v674
        %v707 = vrsqrt.pop %v675
        %v708 = vrsqrt.pop %v676
        %v709 = vrsqrt.pop %v677
        %v710 = vrsqrt.pop %v678
        %v711 = vrsqrt.pop %v679
        %v712 = vrsqrt.pop %v680
        %v713 = vrsqrt.pop %v681
        %v714 = vrsqrt.pop %v682
        %v715 = vrsqrt.pop %v683
        %v716 = vrsqrt.pop %v684
        %v717 = vrsqrt.pop %v685
        %v718 = vrsqrt.pop %v686
        %v719 = vrsqrt.pop %v687
        %v720 = vrsqrt.pop %v688
        %v721 = vrsqrt.pop %v689
        %v722 = vrsqrt.pop %v690
        %v723 = vrsqrt.pop %v691
        %v724 = vrsqrt.pop %v692
        %v725 = vrsqrt.pop %v693
        %v726 = vrsqrt.pop %v694
        %v727 = vrsqrt.pop %v695
        %v728 = vrsqrt.pop %v696
        %v729 = vrsqrt.pop %v697
        %v730 = vrsqrt.pop %v698
        %v731 = vrsqrt.pop %v699
        %v732 = vrsqrt.pop %v700
        %v733 = vrsqrt.pop %v701
        %v734 = vrsqrt.pop %v702
        %v735 = vmul.f32 %v479, %v703
        %v736 = vmul.f32 %v480, %v704
        %v737 = vmul.f32 %v481, %v705
        %v738 = vmul.f32 %v482, %v706
        %v739 = vmul.f32 %v483, %v707
        %v740 = vmul.f32 %v484, %v708
        %v741 = vmul.f32 %v485, %v709
        %v742 = vmul.f32 %v486, %v710
        %v743 = vmul.f32 %v487, %v711
        %v744 = vmul.f32 %v488, %v712
        %v745 = vmul.f32 %v489, %v713
        %v746 = vmul.f32 %v490, %v714
        %v747 = vmul.f32 %v491, %v715
        %v748 = vmul.f32 %v492, %v716
        %v749 = vmul.f32 %v493, %v717
        %v750 = vmul.f32 %v494, %v718
        %v751 = vmul.f32 %v495, %v719
        %v752 = vmul.f32 %v496, %v720
        %v753 = vmul.f32 %v497, %v721
        %v754 = vmul.f32 %v498, %v722
        %v755 = vmul.f32 %v499, %v723
        %v756 = vmul.f32 %v500, %v724
        %v757 = vmul.f32 %v501, %v725
        %v758 = vmul.f32 %v502, %v726
        %v759 = vmul.f32 %v503, %v727
        %v760 = vmul.f32 %v504, %v728
        %v761 = vmul.f32 %v505, %v729
        %v762 = vmul.f32 %v506, %v730
        %v763 = vmul.f32 %v507, %v731
        %v764 = vmul.f32 %v508, %v732
        %v765 = vmul.f32 %v509, %v733
        %v766 = vmul.f32 %v510, %v734
        %v767 = vld [vmem:[%s1] sm:$0x1]
        %v769 = vlaneseq
        %v770 = vshrl.u32 %v769, 7
        %v771 = vsub.s32 0, %v770
        %v772 = vrot.slane %v767, %v771
        %v774 = vmul.f32 %v735, %v772
        %v775 = vmul.f32 %v736, %v772
        %v776 = vmul.f32 %v737, %v772
        %v777 = vmul.f32 %v738, %v772
        %v778 = vmul.f32 %v739, %v772
        %v779 = vmul.f32 %v740, %v772
        %v780 = vmul.f32 %v741, %v772
        %v781 = vmul.f32 %v742, %v772
        %v782 = vmul.f32 %v743, %v772
        %v783 = vmul.f32 %v744, %v772
        %v784 = vmul.f32 %v745, %v772
        %v785 = vmul.f32 %v746, %v772
        %v786 = vmul.f32 %v747, %v772
        %v787 = vmul.f32 %v748, %v772
        %v788 = vmul.f32 %v749, %v772
        %v789 = vmul.f32 %v750, %v772
        %v790 = vmul.f32 %v751, %v772
        %v791 = vmul.f32 %v752, %v772
        %v792 = vmul.f32 %v753, %v772
        %v793 = vmul.f32 %v754, %v772
        %v794 = vmul.f32 %v755, %v772
        %v795 = vmul.f32 %v756, %v772
        %v796 = vmul.f32 %v757, %v772
        %v797 = vmul.f32 %v758, %v772
        %v798 = vmul.f32 %v759, %v772
        %v799 = vmul.f32 %v760, %v772
        %v800 = vmul.f32 %v761, %v772
        %v801 = vmul.f32 %v762, %v772
        %v802 = vmul.f32 %v763, %v772
        %v803 = vmul.f32 %v764, %v772
        %v804 = vmul.f32 %v765, %v772
        %v805 = vmul.f32 %v766, %v772
        %v806 = vld [vmem:[%s2] sm:$0x1]
        %v808 = vlaneseq
        %v809 = vshrl.u32 %v808, 7
        %v810 = vsub.s32 0, %v809
        %v811 = vrot.slane %v806, %v810
        %v813 = vadd.f32 %v774, %v811
        %v814 = vadd.f32 %v775, %v811
        %v815 = vadd.f32 %v776, %v811
        %v816 = vadd.f32 %v777, %v811
        %v817 = vadd.f32 %v778, %v811
        %v818 = vadd.f32 %v779, %v811
        %v819 = vadd.f32 %v780, %v811
        %v820 = vadd.f32 %v781, %v811
        %v821 = vadd.f32 %v782, %v811
        %v822 = vadd.f32 %v783, %v811
        %v823 = vadd.f32 %v784, %v811
        %v824 = vadd.f32 %v785, %v811
        %v825 = vadd.f32 %v786, %v811
        %v826 = vadd.f32 %v787, %v811
        %v827 = vadd.f32 %v788, %v811
        %v828 = vadd.f32 %v789, %v811
        %v829 = vadd.f32 %v790, %v811
        %v830 = vadd.f32 %v791, %v811
        %v831 = vadd.f32 %v792, %v811
        %v832 = vadd.f32 %v793, %v811
        %v833 = vadd.f32 %v794, %v811
        %v834 = vadd.f32 %v795, %v811
        %v835 = vadd.f32 %v796, %v811
        %v836 = vadd.f32 %v797, %v811
        %v837 = vadd.f32 %v798, %v811
        %v838 = vadd.f32 %v799, %v811
        %v839 = vadd.f32 %v800, %v811
        %v840 = vadd.f32 %v801, %v811
        %v841 = vadd.f32 %v802, %v811
        %v842 = vadd.f32 %v803, %v811
        %v843 = vadd.f32 %v804, %v811
        %v844 = vadd.f32 %v805, %v811
        %v845 = vld [vmem:[%s3] sm:$0xf]
        %v846 = vld [vmem:[%s4] sm:$0x1]
        %v848 = vlaneseq
        %v849 = vshrl.u32 %v848, 7
        %v850 = vsub.s32 0, %v849
        %v851 = vrot.slane %v846, %v850
        %v854 = vsel %vm349, %v813, 0
        %v857 = vsel %vm349, %v814, 0
        %v860 = vsel %vm349, %v815, 0
        %v863 = vsel %vm349, %v816, 0
        %v866 = vsel %vm349, %v817, 0
        %v869 = vsel %vm349, %v818, 0
        %v872 = vsel %vm349, %v819, 0
        %v875 = vsel %vm349, %v820, 0
        %v878 = vsel %vm349, %v821, 0
        %v881 = vsel %vm349, %v822, 0
        %v884 = vsel %vm349, %v823, 0
        %v887 = vsel %vm349, %v824, 0
        %v890 = vsel %vm349, %v825, 0
        %v893 = vsel %vm349, %v826, 0
        %v896 = vsel %vm349, %v827, 0
        %v899 = vsel %vm349, %v828, 0
        %v902 = vsel %vm349, %v829, 0
        %v905 = vsel %vm349, %v830, 0
        %v908 = vsel %vm349, %v831, 0
        %v911 = vsel %vm349, %v832, 0
        %v914 = vsel %vm349, %v833, 0
        %v917 = vsel %vm349, %v834, 0
        %v920 = vsel %vm349, %v835, 0
        %v923 = vsel %vm349, %v836, 0
        %v926 = vsel %vm349, %v837, 0
        %v929 = vsel %vm349, %v838, 0
        %v932 = vsel %vm349, %v839, 0
        %v935 = vsel %vm349, %v840, 0
        %v938 = vsel %vm349, %v841, 0
        %v941 = vsel %vm349, %v842, 0
        %v944 = vsel %vm349, %v843, 0
        %v947 = vsel %vm349, %v844, 0
        %vm949 = vcmask 1043456
        %v951 = vsel %vm949, %v845, 0
        %953 = vmatprep.subr.mxu0 0.0
        %954 = vmatpush1.msra.mxu0 0.0
        %955 = vmatprep.subr.mxu0 0.0
        %956 = vmatpush1.msra.mxu0 0.0
        %957 = vmatprep.subr.mxu0 0.0
        %958 = vmatpush1.msra.mxu0 0.0
        %959 = vmatprep.subr.mxu0 0.0
        %960 = vmatpush1.msra.mxu0 0.0
        %961 = vmatprep.subr.mxu0 0.0
        %962 = vmatpush1.msra.mxu0 0.0
        %963 = vmatprep.subr.mxu0 0.0
        %964 = vmatpush1.msra.mxu0 0.0
        %965 = vmatprep.subr.mxu0 0.0
        %966 = vmatpush1.msra.mxu0 0.0
        %967 = vmatprep.subr.mxu0 0.0
        %968 = vmatpush1.msra.mxu0 0.0
        %969 = vmatprep.subr.mxu0 0.0
        %970 = vmatpush1.msra.mxu0 0.0
        %971 = vmatprep.subr.mxu0 0.0
        %972 = vmatpush1.msra.mxu0 0.0
        %973 = vmatprep.subr.mxu0 0.0
        %974 = vmatpush1.msra.mxu0 0.0
        %975 = vmatprep.subr.mxu0 0.0
        %976 = vmatpush1.msra.mxu0 0.0
        %977 = vmatprep.subr.mxu0 0.0
        %978 = vmatpush1.msra.mxu0 0.0
        %979 = vmatprep.subr.mxu0 0.0
        %980 = vmatpush1.msra.mxu0 0.0
        %981 = vmatprep.subr.mxu0 0.0
        %982 = vmatpush1.msra.mxu0 0.0
        %983 = vmatprep.subr.mxu0 0.0
        %984 = vmatpush1.msra.mxu0 %v951
        %985 = vmatprep.subr.mxu0 0.0
        %986 = vmatpush2.msra.mxu0 0.0
        %987 = vmatprep.subr.mxu0 0.0
        %988 = vmatpush2.msra.mxu0 0.0
        %989 = vmatprep.subr.mxu0 0.0
        %990 = vmatpush2.msra.mxu0 0.0
        %991 = vmatprep.subr.mxu0 0.0
        %992 = vmatpush2.msra.mxu0 0.0
        %993 = vmatprep.subr.mxu0 0.0
        %994 = vmatpush2.msra.mxu0 0.0
        %995 = vmatprep.subr.mxu0 0.0
        %996 = vmatpush2.msra.mxu0 0.0
        %997 = vmatprep.subr.mxu0 0.0
        %998 = vmatpush2.msra.mxu0 0.0
        %999 = vmatprep.subr.mxu0 0.0
        %1000 = vmatpush2.msra.mxu0 0.0
        %1001 = vmatprep.subr.mxu0 0.0
        %1002 = vmatpush2.msra.mxu0 0.0
        %1003 = vmatprep.subr.mxu0 0.0
        %1004 = vmatpush2.msra.mxu0 0.0
        %1005 = vmatprep.subr.mxu0 0.0
        %1006 = vmatpush2.msra.mxu0 0.0
        %1007 = vmatprep.subr.mxu0 0.0
        %1008 = vmatpush2.msra.mxu0 0.0
        %1009 = vmatprep.subr.mxu0 0.0
        %1010 = vmatpush2.msra.mxu0 0.0
        %1011 = vmatprep.subr.mxu0 0.0
        %1012 = vmatpush2.msra.mxu0 0.0
        %1013 = vmatprep.subr.mxu0 0.0
        %1014 = vmatpush2.msra.mxu0 0.0
        %1015 = vmatprep.subr.mxu0 0.0
        %1016 = vmatpush2.msra.mxu0 0.0
        %1017 = vmatprep.mubr.f32.mxu0 0.0
        %1018 = vmatmul.mubr.f32.gmra.mxu0 %v854
        %v1019 = vpop.f32.mrf.mxu0
        %v1020 = vadd.f32 %v851, %v1019
        %v1021 = vpop.f32.mrf.mxu0
        %1022 = vmatprep.mubr.f32.mxu0 0.0
        %1023 = vmatmul.mubr.f32.gmra.mxu0 %v857
        %v1024 = vpop.f32.mrf.mxu0
        %v1025 = vadd.f32 %v851, %v1024
        %v1026 = vpop.f32.mrf.mxu0
        %1027 = vmatprep.mubr.f32.mxu0 0.0
        %1028 = vmatmul.mubr.f32.gmra.mxu0 %v860
        %v1029 = vpop.f32.mrf.mxu0
        %v1030 = vadd.f32 %v851, %v1029
        %v1031 = vpop.f32.mrf.mxu0
        %1032 = vmatprep.mubr.f32.mxu0 0.0
        %1033 = vmatmul.mubr.f32.gmra.mxu0 %v863
        %v1034 = vpop.f32.mrf.mxu0
        %v1035 = vadd.f32 %v851, %v1034
        %v1036 = vpop.f32.mrf.mxu0
        %1037 = vmatprep.mubr.f32.mxu0 0.0
        %1038 = vmatmul.mubr.f32.gmra.mxu0 %v866
        %v1039 = vpop.f32.mrf.mxu0
        %v1040 = vadd.f32 %v851, %v1039
        %v1041 = vpop.f32.mrf.mxu0
        %1042 = vmatprep.mubr.f32.mxu0 0.0
        %1043 = vmatmul.mubr.f32.gmra.mxu0 %v869
        %v1044 = vpop.f32.mrf.mxu0
        %v1045 = vadd.f32 %v851, %v1044
        %v1046 = vpop.f32.mrf.mxu0
        %1047 = vmatprep.mubr.f32.mxu0 0.0
        %1048 = vmatmul.mubr.f32.gmra.mxu0 %v872
        %v1049 = vpop.f32.mrf.mxu0
        %v1050 = vadd.f32 %v851, %v1049
        %v1051 = vpop.f32.mrf.mxu0
        %1052 = vmatprep.mubr.f32.mxu0 0.0
        %1053 = vmatmul.mubr.f32.gmra.mxu0 %v875
        %v1054 = vpop.f32.mrf.mxu0
        %v1055 = vadd.f32 %v851, %v1054
        %v1056 = vpop.f32.mrf.mxu0
        %1057 = vmatprep.mubr.f32.mxu0 0.0
        %1058 = vmatmul.mubr.f32.gmra.mxu0 %v878
        %v1059 = vpop.f32.mrf.mxu0
        %v1060 = vadd.f32 %v851, %v1059
        %v1061 = vpop.f32.mrf.mxu0
        %1062 = vmatprep.mubr.f32.mxu0 0.0
        %1063 = vmatmul.mubr.f32.gmra.mxu0 %v881
        %v1064 = vpop.f32.mrf.mxu0
        %v1065 = vadd.f32 %v851, %v1064
        %v1066 = vpop.f32.mrf.mxu0
        %1067 = vmatprep.mubr.f32.mxu0 0.0
        %1068 = vmatmul.mubr.f32.gmra.mxu0 %v884
        %v1069 = vpop.f32.mrf.mxu0
        %v1070 = vadd.f32 %v851, %v1069
        %v1071 = vpop.f32.mrf.mxu0
        %1072 = vmatprep.mubr.f32.mxu0 0.0
        %1073 = vmatmul.mubr.f32.gmra.mxu0 %v887
        %v1074 = vpop.f32.mrf.mxu0
        %v1075 = vadd.f32 %v851, %v1074
        %v1076 = vpop.f32.mrf.mxu0
        %1077 = vmatprep.mubr.f32.mxu0 0.0
        %1078 = vmatmul.mubr.f32.gmra.mxu0 %v890
        %v1079 = vpop.f32.mrf.mxu0
        %v1080 = vadd.f32 %v851, %v1079
        %v1081 = vpop.f32.mrf.mxu0
        %1082 = vmatprep.mubr.f32.mxu0 0.0
        %1083 = vmatmul.mubr.f32.gmra.mxu0 %v893
        %v1084 = vpop.f32.mrf.mxu0
        %v1085 = vadd.f32 %v851, %v1084
        %v1086 = vpop.f32.mrf.mxu0
        %1087 = vmatprep.mubr.f32.mxu0 0.0
        %1088 = vmatmul.mubr.f32.gmra.mxu0 %v896
        %v1089 = vpop.f32.mrf.mxu0
        %v1090 = vadd.f32 %v851, %v1089
        %v1091 = vpop.f32.mrf.mxu0
        %1092 = vmatprep.mubr.f32.mxu0 0.0
        %1093 = vmatmul.mubr.f32.gmra.mxu0 %v899
        %v1094 = vpop.f32.mrf.mxu0
        %v1095 = vadd.f32 %v851, %v1094
        %v1096 = vpop.f32.mrf.mxu0
        %1097 = vmatprep.mubr.f32.mxu0 0.0
        %1098 = vmatmul.mubr.f32.gmra.mxu0 %v902
        %v1099 = vpop.f32.mrf.mxu0
        %v1100 = vadd.f32 %v851, %v1099
        %v1101 = vpop.f32.mrf.mxu0
        %1102 = vmatprep.mubr.f32.mxu0 0.0
        %1103 = vmatmul.mubr.f32.gmra.mxu0 %v905
        %v1104 = vpop.f32.mrf.mxu0
        %v1105 = vadd.f32 %v851, %v1104
        %v1106 = vpop.f32.mrf.mxu0
        %1107 = vmatprep.mubr.f32.mxu0 0.0
        %1108 = vmatmul.mubr.f32.gmra.mxu0 %v908
        %v1109 = vpop.f32.mrf.mxu0
        %v1110 = vadd.f32 %v851, %v1109
        %v1111 = vpop.f32.mrf.mxu0
        %1112 = vmatprep.mubr.f32.mxu0 0.0
        %1113 = vmatmul.mubr.f32.gmra.mxu0 %v911
        %v1114 = vpop.f32.mrf.mxu0
        %v1115 = vadd.f32 %v851, %v1114
        %v1116 = vpop.f32.mrf.mxu0
        %1117 = vmatprep.mubr.f32.mxu0 0.0
        %1118 = vmatmul.mubr.f32.gmra.mxu0 %v914
        %v1119 = vpop.f32.mrf.mxu0
        %v1120 = vadd.f32 %v851, %v1119
        %v1121 = vpop.f32.mrf.mxu0
        %1122 = vmatprep.mubr.f32.mxu0 0.0
        %1123 = vmatmul.mubr.f32.gmra.mxu0 %v917
        %v1124 = vpop.f32.mrf.mxu0
        %v1125 = vadd.f32 %v851, %v1124
        %v1126 = vpop.f32.mrf.mxu0
        %1127 = vmatprep.mubr.f32.mxu0 0.0
        %1128 = vmatmul.mubr.f32.gmra.mxu0 %v920
        %v1129 = vpop.f32.mrf.mxu0
        %v1130 = vadd.f32 %v851, %v1129
        %v1131 = vpop.f32.mrf.mxu0
        %1132 = vmatprep.mubr.f32.mxu0 0.0
        %1133 = vmatmul.mubr.f32.gmra.mxu0 %v923
        %v1134 = vpop.f32.mrf.mxu0
        %v1135 = vadd.f32 %v851, %v1134
        %v1136 = vpop.f32.mrf.mxu0
        %1137 = vmatprep.mubr.f32.mxu0 0.0
        %1138 = vmatmul.mubr.f32.gmra.mxu0 %v926
        %v1139 = vpop.f32.mrf.mxu0
        %v1140 = vadd.f32 %v851, %v1139
        %v1141 = vpop.f32.mrf.mxu0
        %1142 = vmatprep.mubr.f32.mxu0 0.0
        %1143 = vmatmul.mubr.f32.gmra.mxu0 %v929
        %v1144 = vpop.f32.mrf.mxu0
        %v1145 = vadd.f32 %v851, %v1144
        %v1146 = vpop.f32.mrf.mxu0
        %1147 = vmatprep.mubr.f32.mxu0 0.0
        %1148 = vmatmul.mubr.f32.gmra.mxu0 %v932
        %v1149 = vpop.f32.mrf.mxu0
        %v1150 = vadd.f32 %v851, %v1149
        %v1151 = vpop.f32.mrf.mxu0
        %1152 = vmatprep.mubr.f32.mxu0 0.0
        %1153 = vmatmul.mubr.f32.gmra.mxu0 %v935
        %v1154 = vpop.f32.mrf.mxu0
        %v1155 = vadd.f32 %v851, %v1154
        %v1156 = vpop.f32.mrf.mxu0
        %1157 = vmatprep.mubr.f32.mxu0 0.0
        %1158 = vmatmul.mubr.f32.gmra.mxu0 %v938
        %v1159 = vpop.f32.mrf.mxu0
        %v1160 = vadd.f32 %v851, %v1159
        %v1161 = vpop.f32.mrf.mxu0
        %1162 = vmatprep.mubr.f32.mxu0 0.0
        %1163 = vmatmul.mubr.f32.gmra.mxu0 %v941
        %v1164 = vpop.f32.mrf.mxu0
        %v1165 = vadd.f32 %v851, %v1164
        %v1166 = vpop.f32.mrf.mxu0
        %1167 = vmatprep.mubr.f32.mxu0 0.0
        %1168 = vmatmul.mubr.f32.gmra.mxu0 %v944
        %v1169 = vpop.f32.mrf.mxu0
        %v1170 = vadd.f32 %v851, %v1169
        %v1171 = vpop.f32.mrf.mxu0
        %1172 = vmatprep.mubr.f32.mxu0 0.0
        %1173 = vmatmul.mubr.f32.gmra.mxu0 %v947
        %v1174 = vpop.f32.mrf.mxu0
        %v1175 = vadd.f32 %v851, %v1174
        %v1176 = vpop.f32.mrf.mxu0
        %1177 = vdwg.mxu0
        %s1178 = scalar_lea.vmem [#allocation2], 24
        %vm1179 = vcmask 195584
        %1180 = vst.msk [vmem:[%s1178 + $0x1] sm:$0xff] %vm1179, %v1020
        %1181 = vst.msk [vmem:[%s1178 + $0x9] sm:$0xff] %vm1179, %v1025
        %1182 = vst.msk [vmem:[%s1178 + $0x19] sm:$0xff] %vm1179, %v1030
        %1183 = vst.msk [vmem:[%s1178 + $0x21] sm:$0xff] %vm1179, %v1035
        %1184 = vst.msk [vmem:[%s1178 + $0x31] sm:$0xff] %vm1179, %v1040
        %1185 = vst.msk [vmem:[%s1178 + $0x39] sm:$0xff] %vm1179, %v1045
        %1186 = vst.msk [vmem:[%s1178 + $0x49] sm:$0xff] %vm1179, %v1050
        %1187 = vst.msk [vmem:[%s1178 + $0x51] sm:$0xff] %vm1179, %v1055
        %1188 = vst.msk [vmem:[%s1178 + $0x61] sm:$0xff] %vm1179, %v1060
        %1189 = vst.msk [vmem:[%s1178 + $0x69] sm:$0xff] %vm1179, %v1065
        %1190 = vst.msk [vmem:[%s1178 + $0x79] sm:$0xff] %vm1179, %v1070
        %1191 = vst.msk [vmem:[%s1178 + $0x81] sm:$0xff] %vm1179, %v1075
        %1192 = vst.msk [vmem:[%s1178 + $0x91] sm:$0xff] %vm1179, %v1080
        %1193 = vst.msk [vmem:[%s1178 + $0x99] sm:$0xff] %vm1179, %v1085
        %1194 = vst.msk [vmem:[%s1178 + $0xa9] sm:$0xff] %vm1179, %v1090
        %1195 = vst.msk [vmem:[%s1178 + $0xb1] sm:$0xff] %vm1179, %v1095
        %1196 = vst.msk [vmem:[%s1178 + $0xc1] sm:$0xff] %vm1179, %v1100
        %1197 = vst.msk [vmem:[%s1178 + $0xc9] sm:$0xff] %vm1179, %v1105
        %1198 = vst.msk [vmem:[%s1178 + $0xd9] sm:$0xff] %vm1179, %v1110
        %1199 = vst.msk [vmem:[%s1178 + $0xe1] sm:$0xff] %vm1179, %v1115
        %1200 = vst.msk [vmem:[%s1178 + $0xf1] sm:$0xff] %vm1179, %v1120
        %1201 = vst.msk [vmem:[%s1178 + $0xf9] sm:$0xff] %vm1179, %v1125
        %1202 = vst.msk [vmem:[%s1178 + $0x109] sm:$0xff] %vm1179, %v1130
        %1203 = vst.msk [vmem:[%s1178 + $0x111] sm:$0xff] %vm1179, %v1135
        %1204 = vst.msk [vmem:[%s1178 + $0x121] sm:$0xff] %vm1179, %v1140
        %1205 = vst.msk [vmem:[%s1178 + $0x129] sm:$0xff] %vm1179, %v1145
        %1206 = vst.msk [vmem:[%s1178 + $0x139] sm:$0xff] %vm1179, %v1150
        %1207 = vst.msk [vmem:[%s1178 + $0x141] sm:$0xff] %vm1179, %v1155
        %1208 = vst.msk [vmem:[%s1178 + $0x151] sm:$0xff] %vm1179, %v1160
        %1209 = vst.msk [vmem:[%s1178 + $0x159] sm:$0xff] %vm1179, %v1165
        %1210 = vst.msk [vmem:[%s1178 + $0x169] sm:$0xff] %vm1179, %v1170
        %1211 = vst.msk [vmem:[%s1178 + $0x171] sm:$0xff] %vm1179, %v1175
        %1212 = vst.msk [vmem:[#allocation2] sm:$0xff] %vm1179, 0.0
        %1213 = vst.msk [vmem:[#allocation2 + $0x8] sm:$0xff] %vm1179, 0.0
        %vm1214 = vcmask 189440
        %1215 = vst.msk [vmem:[#allocation2 + $0x10] sm:$0x3] %vm1214, 0.0
        %s1216 = scalar_lea.vmem [#allocation2], 408
        %1217 = vst.msk [vmem:[%s1216] sm:$0xff] %vm1179, 0.0
        %1218 = vst.msk [vmem:[%s1216 + $0x8] sm:$0xff] %vm1179, 0.0
        %1219 = vst.msk [vmem:[%s1216 + $0x10] sm:$0x3] %vm1214, 0.0
        %vm1220 = vcmask 188416
        %1221 = vst.msk [vmem:[#allocation2] sm:$0x1] %vm1220, 0.0
        %1222 = vst.msk [vmem:[#allocation2 + $0x18] sm:$0x1] %vm1220, 0.0
        %1223 = vst.msk [vmem:[#allocation2 + $0x30] sm:$0x1] %vm1220, 0.0
        %1224 = vst.msk [vmem:[#allocation2 + $0x48] sm:$0x1] %vm1220, 0.0
        %1225 = vst.msk [vmem:[#allocation2 + $0x60] sm:$0x1] %vm1220, 0.0
        %1226 = vst.msk [vmem:[#allocation2 + $0x78] sm:$0x1] %vm1220, 0.0
        %1227 = vst.msk [vmem:[#allocation2 + $0x90] sm:$0x1] %vm1220, 0.0
        %1228 = vst.msk [vmem:[#allocation2 + $0xa8] sm:$0x1] %vm1220, 0.0
        %1229 = vst.msk [vmem:[#allocation2 + $0xc0] sm:$0x1] %vm1220, 0.0
        %1230 = vst.msk [vmem:[#allocation2 + $0xd8] sm:$0x1] %vm1220, 0.0
        %1231 = vst.msk [vmem:[#allocation2 + $0xf0] sm:$0x1] %vm1220, 0.0
        %1232 = vst.msk [vmem:[#allocation2 + $0x108] sm:$0x1] %vm1220, 0.0
        %1233 = vst.msk [vmem:[#allocation2 + $0x120] sm:$0x1] %vm1220, 0.0
        %1234 = vst.msk [vmem:[#allocation2 + $0x138] sm:$0x1] %vm1220, 0.0
        %1235 = vst.msk [vmem:[#allocation2 + $0x150] sm:$0x1] %vm1220, 0.0
        %1236 = vst.msk [vmem:[#allocation2 + $0x168] sm:$0x1] %vm1220, 0.0
        %1237 = vst.msk [vmem:[#allocation2 + $0x180] sm:$0x1] %vm1220, 0.0
        %1238 = vst.msk [vmem:[#allocation2 + $0x198] sm:$0x1] %vm1220, 0.0
        %1239 = vst.msk [vmem:[#allocation2 + $0x11] sm:$0x1] %vm1220, 0.0
        %1240 = vst.msk [vmem:[#allocation2 + $0x29] sm:$0x1] %vm1220, 0.0
        %1241 = vst.msk [vmem:[#allocation2 + $0x41] sm:$0x1] %vm1220, 0.0
        %1242 = vst.msk [vmem:[#allocation2 + $0x59] sm:$0x1] %vm1220, 0.0
        %1243 = vst.msk [vmem:[#allocation2 + $0x71] sm:$0x1] %vm1220, 0.0
        %1244 = vst.msk [vmem:[#allocation2 + $0x89] sm:$0x1] %vm1220, 0.0
        %1245 = vst.msk [vmem:[#allocation2 + $0xa1] sm:$0x1] %vm1220, 0.0
        %1246 = vst.msk [vmem:[#allocation2 + $0xb9] sm:$0x1] %vm1220, 0.0
        %1247 = vst.msk [vmem:[#allocation2 + $0xd1] sm:$0x1] %vm1220, 0.0
        %1248 = vst.msk [vmem:[#allocation2 + $0xe9] sm:$0x1] %vm1220, 0.0
        %1249 = vst.msk [vmem:[#allocation2 + $0x101] sm:$0x1] %vm1220, 0.0
        %1250 = vst.msk [vmem:[#allocation2 + $0x119] sm:$0x1] %vm1220, 0.0
        %1251 = vst.msk [vmem:[#allocation2 + $0x131] sm:$0x1] %vm1220, 0.0
        %1252 = vst.msk [vmem:[#allocation2 + $0x149] sm:$0x1] %vm1220, 0.0
        %1253 = vst.msk [vmem:[#allocation2 + $0x161] sm:$0x1] %vm1220, 0.0
        %1254 = vst.msk [vmem:[#allocation2 + $0x179] sm:$0x1] %vm1220, 0.0
        %1255 = vst.msk [vmem:[#allocation2 + $0x191] sm:$0x1] %vm1220, 0.0
        %1256 = vst.msk [vmem:[#allocation2 + $0x1a9] sm:$0x1] %vm1220, 0.0
        %v1257 = vld [vmem:[%s5] sm:$0xff]
        %v1258 = vld [vmem:[%s5 + $0x8] sm:$0x1]
        %v1259 = vld [vmem:[#allocation2] sm:$0xff]
        %v1260 = vld [vmem:[#allocation2 + $0x8] sm:$0xff]
        %v1261 = vld [vmem:[#allocation2 + $0x18] sm:$0xff]
        %v1262 = vld [vmem:[#allocation2 + $0x20] sm:$0xff]
        %v1263 = vld [vmem:[#allocation2 + $0x30] sm:$0xff]
        %v1264 = vld [vmem:[#allocation2 + $0x38] sm:$0xff]
        %v1265 = vld [vmem:[#allocation2 + $0x48] sm:$0xff]
        %v1266 = vld [vmem:[#allocation2 + $0x50] sm:$0xff]
        %v1267 = vld [vmem:[#allocation2 + $0x60] sm:$0xff]
        %v1268 = vld [vmem:[#allocation2 + $0x68] sm:$0xff]
        %v1269 = vld [vmem:[#allocation2 + $0x78] sm:$0xff]
        %v1270 = vld [vmem:[#allocation2 + $0x80] sm:$0xff]
        %v1271 = vld [vmem:[#allocation2 + $0x90] sm:$0xff]
        %v1272 = vld [vmem:[#allocation2 + $0x98] sm:$0xff]
        %v1273 = vld [vmem:[#allocation2 + $0xa8] sm:$0xff]
        %v1274 = vld [vmem:[#allocation2 + $0xb0] sm:$0xff]
        %v1275 = vld [vmem:[#allocation2 + $0xc0] sm:$0xff]
        %v1276 = vld [vmem:[#allocation2 + $0xc8] sm:$0xff]
        %v1277 = vld [vmem:[#allocation2 + $0xd8] sm:$0xff]
        %v1278 = vld [vmem:[#allocation2 + $0xe0] sm:$0xff]
        %v1279 = vld [vmem:[#allocation2 + $0xf0] sm:$0xff]
        %v1280 = vld [vmem:[#allocation2 + $0xf8] sm:$0xff]
        %v1281 = vld [vmem:[#allocation2 + $0x108] sm:$0xff]
        %v1282 = vld [vmem:[#allocation2 + $0x110] sm:$0xff]
        %v1283 = vld [vmem:[#allocation2 + $0x120] sm:$0xff]
        %v1284 = vld [vmem:[#allocation2 + $0x128] sm:$0xff]
        %v1285 = vld [vmem:[#allocation2 + $0x138] sm:$0xff]
        %v1286 = vld [vmem:[#allocation2 + $0x140] sm:$0xff]
        %v1287 = vld [vmem:[#allocation2 + $0x150] sm:$0xff]
        %v1288 = vld [vmem:[#allocation2 + $0x158] sm:$0xff]
        %v1289 = vld [vmem:[#allocation2 + $0x168] sm:$0xff]
        %v1290 = vld [vmem:[#allocation2 + $0x170] sm:$0xff]
        %v1291 = vlaneseq
        %v1292 = vshrl.u32 %v1291, 7
        %v1293 = vsub.s32 0, %v1292
        %v1294 = vrot.slane %v1257, %v1293
        %v1295 = vmul.f32 %v1259, %v1294
        %v1296 = vmul.f32 %v1260, %v1294
        %v1297 = vmul.f32 %v1261, %v1294
        %v1298 = vmul.f32 %v1262, %v1294
        %v1299 = vmul.f32 %v1263, %v1294
        %v1300 = vmul.f32 %v1264, %v1294
        %v1301 = vmul.f32 %v1265, %v1294
        %v1302 = vmul.f32 %v1266, %v1294
        %v1303 = vmul.f32 %v1267, %v1294
        %v1304 = vmul.f32 %v1268, %v1294
        %v1305 = vmul.f32 %v1269, %v1294
        %v1306 = vmul.f32 %v1270, %v1294
        %v1307 = vmul.f32 %v1271, %v1294
        %v1308 = vmul.f32 %v1272, %v1294
        %v1309 = vmul.f32 %v1273, %v1294
        %v1310 = vmul.f32 %v1274, %v1294
        %v1311 = vmul.f32 %v1275, %v1294
        %v1312 = vmul.f32 %v1276, %v1294
        %v1313 = vmul.f32 %v1277, %v1294
        %v1314 = vmul.f32 %v1278, %v1294
        %v1315 = vmul.f32 %v1279, %v1294
        %v1316 = vmul.f32 %v1280, %v1294
        %v1317 = vmul.f32 %v1281, %v1294
        %v1318 = vmul.f32 %v1282, %v1294
        %v1319 = vmul.f32 %v1283, %v1294
        %v1320 = vmul.f32 %v1284, %v1294
        %v1321 = vmul.f32 %v1285, %v1294
        %v1322 = vmul.f32 %v1286, %v1294
        %v1323 = vmul.f32 %v1287, %v1294
        %v1324 = vmul.f32 %v1288, %v1294
        %v1325 = vmul.f32 %v1289, %v1294
        %v1326 = vmul.f32 %v1290, %v1294
        %v1327 = vadd.f32 %v1295, 0.0
        %v1328 = vadd.f32 %v1296, 0.0
        %v1329 = vadd.f32 %v1297, 0.0
        %v1330 = vadd.f32 %v1298, 0.0
        %v1331 = vadd.f32 %v1299, 0.0
        %v1332 = vadd.f32 %v1300, 0.0
        %v1333 = vadd.f32 %v1301, 0.0
        %v1334 = vadd.f32 %v1302, 0.0
        %v1335 = vadd.f32 %v1303, 0.0
        %v1336 = vadd.f32 %v1304, 0.0
        %v1337 = vadd.f32 %v1305, 0.0
        %v1338 = vadd.f32 %v1306, 0.0
        %v1339 = vadd.f32 %v1307, 0.0
        %v1340 = vadd.f32 %v1308, 0.0
        %v1341 = vadd.f32 %v1309, 0.0
        %v1342 = vadd.f32 %v1310, 0.0
        %v1343 = vadd.f32 %v1311, 0.0
        %v1344 = vadd.f32 %v1312, 0.0
        %v1345 = vadd.f32 %v1313, 0.0
        %v1346 = vadd.f32 %v1314, 0.0
        %v1347 = vadd.f32 %v1315, 0.0
        %v1348 = vadd.f32 %v1316, 0.0
        %v1349 = vadd.f32 %v1317, 0.0
        %v1350 = vadd.f32 %v1318, 0.0
        %v1351 = vadd.f32 %v1319, 0.0
        %v1352 = vadd.f32 %v1320, 0.0
        %v1353 = vadd.f32 %v1321, 0.0
        %v1354 = vadd.f32 %v1322, 0.0
        %v1355 = vadd.f32 %v1323, 0.0
        %v1356 = vadd.f32 %v1324, 0.0
        %v1357 = vadd.f32 %v1325, 0.0
        %v1358 = vadd.f32 %v1326, 0.0
        %v1359 = vld [vmem:[#allocation2 + $0x1] sm:$0xff]
        %v1360 = vld [vmem:[#allocation2 + $0x9] sm:$0xff]
        %v1361 = vld [vmem:[#allocation2 + $0x19] sm:$0xff]
        %v1362 = vld [vmem:[#allocation2 + $0x21] sm:$0xff]
        %v1363 = vld [vmem:[#allocation2 + $0x31] sm:$0xff]
        %v1364 = vld [vmem:[#allocation2 + $0x39] sm:$0xff]
        %v1365 = vld [vmem:[#allocation2 + $0x49] sm:$0xff]
        %v1366 = vld [vmem:[#allocation2 + $0x51] sm:$0xff]
        %v1367 = vld [vmem:[#allocation2 + $0x61] sm:$0xff]
        %v1368 = vld [vmem:[#allocation2 + $0x69] sm:$0xff]
        %v1369 = vld [vmem:[#allocation2 + $0x79] sm:$0xff]
        %v1370 = vld [vmem:[#allocation2 + $0x81] sm:$0xff]
        %v1371 = vld [vmem:[#allocation2 + $0x91] sm:$0xff]
        %v1372 = vld [vmem:[#allocation2 + $0x99] sm:$0xff]
        %v1373 = vld [vmem:[#allocation2 + $0xa9] sm:$0xff]
        %v1374 = vld [vmem:[#allocation2 + $0xb1] sm:$0xff]
        %v1375 = vld [vmem:[#allocation2 + $0xc1] sm:$0xff]
        %v1376 = vld [vmem:[#allocation2 + $0xc9] sm:$0xff]
        %v1377 = vld [vmem:[#allocation2 + $0xd9] sm:$0xff]
        %v1378 = vld [vmem:[#allocation2 + $0xe1] sm:$0xff]
        %v1379 = vld [vmem:[#allocation2 + $0xf1] sm:$0xff]
        %v1380 = vld [vmem:[#allocation2 + $0xf9] sm:$0xff]
        %v1381 = vld [vmem:[#allocation2 + $0x109] sm:$0xff]
        %v1382 = vld [vmem:[#allocation2 + $0x111] sm:$0xff]
        %v1383 = vld [vmem:[#allocation2 + $0x121] sm:$0xff]
        %v1384 = vld [vmem:[#allocation2 + $0x129] sm:$0xff]
        %v1385 = vld [vmem:[#allocation2 + $0x139] sm:$0xff]
        %v1386 = vld [vmem:[#allocation2 + $0x141] sm:$0xff]
        %v1387 = vld [vmem:[#allocation2 + $0x151] sm:$0xff]
        %v1388 = vld [vmem:[#allocation2 + $0x159] sm:$0xff]
        %v1389 = vld [vmem:[#allocation2 + $0x169] sm:$0xff]
        %v1390 = vld [vmem:[#allocation2 + $0x171] sm:$0xff]
        %v1391 = vlaneseq
        %v1392 = vshrl.u32 %v1391, 7
        %v1393 = vsub.s32 1, %v1392
        %v1394 = vrot.slane %v1257, %v1393
        %v1395 = vmul.f32 %v1359, %v1394
        %v1396 = vmul.f32 %v1360, %v1394
        %v1397 = vmul.f32 %v1361, %v1394
        %v1398 = vmul.f32 %v1362, %v1394
        %v1399 = vmul.f32 %v1363, %v1394
        %v1400 = vmul.f32 %v1364, %v1394
        %v1401 = vmul.f32 %v1365, %v1394
        %v1402 = vmul.f32 %v1366, %v1394
        %v1403 = vmul.f32 %v1367, %v1394
        %v1404 = vmul.f32 %v1368, %v1394
        %v1405 = vmul.f32 %v1369, %v1394
        %v1406 = vmul.f32 %v1370, %v1394
        %v1407 = vmul.f32 %v1371, %v1394
        %v1408 = vmul.f32 %v1372, %v1394
        %v1409 = vmul.f32 %v1373, %v1394
        %v1410 = vmul.f32 %v1374, %v1394
        %v1411 = vmul.f32 %v1375, %v1394
        %v1412 = vmul.f32 %v1376, %v1394
        %v1413 = vmul.f32 %v1377, %v1394
        %v1414 = vmul.f32 %v1378, %v1394
        %v1415 = vmul.f32 %v1379, %v1394
        %v1416 = vmul.f32 %v1380, %v1394
        %v1417 = vmul.f32 %v1381, %v1394
        %v1418 = vmul.f32 %v1382, %v1394
        %v1419 = vmul.f32 %v1383, %v1394
        %v1420 = vmul.f32 %v1384, %v1394
        %v1421 = vmul.f32 %v1385, %v1394
        %v1422 = vmul.f32 %v1386, %v1394
        %v1423 = vmul.f32 %v1387, %v1394
        %v1424 = vmul.f32 %v1388, %v1394
        %v1425 = vmul.f32 %v1389, %v1394
        %v1426 = vmul.f32 %v1390, %v1394
        %v1427 = vadd.f32 %v1327, %v1395
        %v1428 = vadd.f32 %v1328, %v1396
        %v1429 = vadd.f32 %v1329, %v1397
        %v1430 = vadd.f32 %v1330, %v1398
        %v1431 = vadd.f32 %v1331, %v1399
        %v1432 = vadd.f32 %v1332, %v1400
        %v1433 = vadd.f32 %v1333, %v1401
        %v1434 = vadd.f32 %v1334, %v1402
        %v1435 = vadd.f32 %v1335, %v1403
        %v1436 = vadd.f32 %v1336, %v1404
        %v1437 = vadd.f32 %v1337, %v1405
        %v1438 = vadd.f32 %v1338, %v1406
        %v1439 = vadd.f32 %v1339, %v1407
        %v1440 = vadd.f32 %v1340, %v1408
        %v1441 = vadd.f32 %v1341, %v1409
        %v1442 = vadd.f32 %v1342, %v1410
        %v1443 = vadd.f32 %v1343, %v1411
        %v1444 = vadd.f32 %v1344, %v1412
        %v1445 = vadd.f32 %v1345, %v1413
        %v1446 = vadd.f32 %v1346, %v1414
        %v1447 = vadd.f32 %v1347, %v1415
        %v1448 = vadd.f32 %v1348, %v1416
        %v1449 = vadd.f32 %v1349, %v1417
        %v1450 = vadd.f32 %v1350, %v1418
        %v1451 = vadd.f32 %v1351, %v1419
        %v1452 = vadd.f32 %v1352, %v1420
        %v1453 = vadd.f32 %v1353, %v1421
        %v1454 = vadd.f32 %v1354, %v1422
        %v1455 = vadd.f32 %v1355, %v1423
        %v1456 = vadd.f32 %v1356, %v1424
        %v1457 = vadd.f32 %v1357, %v1425
        %v1458 = vadd.f32 %v1358, %v1426
        %v1459 = vld [vmem:[#allocation2 + $0x2] sm:$0xff]
        %v1460 = vld [vmem:[#allocation2 + $0xa] sm:$0xff]
        %v1461 = vld [vmem:[#allocation2 + $0x1a] sm:$0xff]
        %v1462 = vld [vmem:[#allocation2 + $0x22] sm:$0xff]
        %v1463 = vld [vmem:[#allocation2 + $0x32] sm:$0xff]
        %v1464 = vld [vmem:[#allocation2 + $0x3a] sm:$0xff]
        %v1465 = vld [vmem:[#allocation2 + $0x4a] sm:$0xff]
        %v1466 = vld [vmem:[#allocation2 + $0x52] sm:$0xff]
        %v1467 = vld [vmem:[#allocation2 + $0x62] sm:$0xff]
        %v1468 = vld [vmem:[#allocation2 + $0x6a] sm:$0xff]
        %v1469 = vld [vmem:[#allocation2 + $0x7a] sm:$0xff]
        %v1470 = vld [vmem:[#allocation2 + $0x82] sm:$0xff]
        %v1471 = vld [vmem:[#allocation2 + $0x92] sm:$0xff]
        %v1472 = vld [vmem:[#allocation2 + $0x9a] sm:$0xff]
        %v1473 = vld [vmem:[#allocation2 + $0xaa] sm:$0xff]
        %v1474 = vld [vmem:[#allocation2 + $0xb2] sm:$0xff]
        %v1475 = vld [vmem:[#allocation2 + $0xc2] sm:$0xff]
        %v1476 = vld [vmem:[#allocation2 + $0xca] sm:$0xff]
        %v1477 = vld [vmem:[#allocation2 + $0xda] sm:$0xff]
        %v1478 = vld [vmem:[#allocation2 + $0xe2] sm:$0xff]
        %v1479 = vld [vmem:[#allocation2 + $0xf2] sm:$0xff]
        %v1480 = vld [vmem:[#allocation2 + $0xfa] sm:$0xff]
        %v1481 = vld [vmem:[#allocation2 + $0x10a] sm:$0xff]
        %v1482 = vld [vmem:[#allocation2 + $0x112] sm:$0xff]
        %v1483 = vld [vmem:[#allocation2 + $0x122] sm:$0xff]
        %v1484 = vld [vmem:[#allocation2 + $0x12a] sm:$0xff]
        %v1485 = vld [vmem:[#allocation2 + $0x13a] sm:$0xff]
        %v1486 = vld [vmem:[#allocation2 + $0x142] sm:$0xff]
        %v1487 = vld [vmem:[#allocation2 + $0x152] sm:$0xff]
        %v1488 = vld [vmem:[#allocation2 + $0x15a] sm:$0xff]
        %v1489 = vld [vmem:[#allocation2 + $0x16a] sm:$0xff]
        %v1490 = vld [vmem:[#allocation2 + $0x172] sm:$0xff]
        %v1491 = vlaneseq
        %v1492 = vshrl.u32 %v1491, 7
        %v1493 = vsub.s32 2, %v1492
        %v1494 = vrot.slane %v1257, %v1493
        %v1495 = vmul.f32 %v1459, %v1494
        %v1496 = vmul.f32 %v1460, %v1494
        %v1497 = vmul.f32 %v1461, %v1494
        %v1498 = vmul.f32 %v1462, %v1494
        %v1499 = vmul.f32 %v1463, %v1494
        %v1500 = vmul.f32 %v1464, %v1494
        %v1501 = vmul.f32 %v1465, %v1494
        %v1502 = vmul.f32 %v1466, %v1494
        %v1503 = vmul.f32 %v1467, %v1494
        %v1504 = vmul.f32 %v1468, %v1494
        %v1505 = vmul.f32 %v1469, %v1494
        %v1506 = vmul.f32 %v1470, %v1494
        %v1507 = vmul.f32 %v1471, %v1494
        %v1508 = vmul.f32 %v1472, %v1494
        %v1509 = vmul.f32 %v1473, %v1494
        %v1510 = vmul.f32 %v1474, %v1494
        %v1511 = vmul.f32 %v1475, %v1494
        %v1512 = vmul.f32 %v1476, %v1494
        %v1513 = vmul.f32 %v1477, %v1494
        %v1514 = vmul.f32 %v1478, %v1494
        %v1515 = vmul.f32 %v1479, %v1494
        %v1516 = vmul.f32 %v1480, %v1494
        %v1517 = vmul.f32 %v1481, %v1494
        %v1518 = vmul.f32 %v1482, %v1494
        %v1519 = vmul.f32 %v1483, %v1494
        %v1520 = vmul.f32 %v1484, %v1494
        %v1521 = vmul.f32 %v1485, %v1494
        %v1522 = vmul.f32 %v1486, %v1494
        %v1523 = vmul.f32 %v1487, %v1494
        %v1524 = vmul.f32 %v1488, %v1494
        %v1525 = vmul.f32 %v1489, %v1494
        %v1526 = vmul.f32 %v1490, %v1494
        %v1527 = vadd.f32 %v1427, %v1495
        %v1528 = vadd.f32 %v1428, %v1496
        %v1529 = vadd.f32 %v1429, %v1497
        %v1530 = vadd.f32 %v1430, %v1498
        %v1531 = vadd.f32 %v1431, %v1499
        %v1532 = vadd.f32 %v1432, %v1500
        %v1533 = vadd.f32 %v1433, %v1501
        %v1534 = vadd.f32 %v1434, %v1502
        %v1535 = vadd.f32 %v1435, %v1503
        %v1536 = vadd.f32 %v1436, %v1504
        %v1537 = vadd.f32 %v1437, %v1505
        %v1538 = vadd.f32 %v1438, %v1506
        %v1539 = vadd.f32 %v1439, %v1507
        %v1540 = vadd.f32 %v1440, %v1508
        %v1541 = vadd.f32 %v1441, %v1509
        %v1542 = vadd.f32 %v1442, %v1510
        %v1543 = vadd.f32 %v1443, %v1511
        %v1544 = vadd.f32 %v1444, %v1512
        %v1545 = vadd.f32 %v1445, %v1513
        %v1546 = vadd.f32 %v1446, %v1514
        %v1547 = vadd.f32 %v1447, %v1515
        %v1548 = vadd.f32 %v1448, %v1516
        %v1549 = vadd.f32 %v1449, %v1517
        %v1550 = vadd.f32 %v1450, %v1518
        %v1551 = vadd.f32 %v1451, %v1519
        %v1552 = vadd.f32 %v1452, %v1520
        %v1553 = vadd.f32 %v1453, %v1521
        %v1554 = vadd.f32 %v1454, %v1522
        %v1555 = vadd.f32 %v1455, %v1523
        %v1556 = vadd.f32 %v1456, %v1524
        %v1557 = vadd.f32 %v1457, %v1525
        %v1558 = vadd.f32 %v1458, %v1526
        %v1559 = vld [vmem:[%s1178] sm:$0xff]
        %v1560 = vld [vmem:[%s1178 + $0x8] sm:$0xff]
        %v1561 = vld [vmem:[%s1178 + $0x18] sm:$0xff]
        %v1562 = vld [vmem:[%s1178 + $0x20] sm:$0xff]
        %v1563 = vld [vmem:[%s1178 + $0x30] sm:$0xff]
        %v1564 = vld [vmem:[%s1178 + $0x38] sm:$0xff]
        %v1565 = vld [vmem:[%s1178 + $0x48] sm:$0xff]
        %v1566 = vld [vmem:[%s1178 + $0x50] sm:$0xff]
        %v1567 = vld [vmem:[%s1178 + $0x60] sm:$0xff]
        %v1568 = vld [vmem:[%s1178 + $0x68] sm:$0xff]
        %v1569 = vld [vmem:[%s1178 + $0x78] sm:$0xff]
        %v1570 = vld [vmem:[%s1178 + $0x80] sm:$0xff]
        %v1571 = vld [vmem:[%s1178 + $0x90] sm:$0xff]
        %v1572 = vld [vmem:[%s1178 + $0x98] sm:$0xff]
        %v1573 = vld [vmem:[%s1178 + $0xa8] sm:$0xff]
        %v1574 = vld [vmem:[%s1178 + $0xb0] sm:$0xff]
        %v1575 = vld [vmem:[%s1178 + $0xc0] sm:$0xff]
        %v1576 = vld [vmem:[%s1178 + $0xc8] sm:$0xff]
        %v1577 = vld [vmem:[%s1178 + $0xd8] sm:$0xff]
        %v1578 = vld [vmem:[%s1178 + $0xe0] sm:$0xff]
        %v1579 = vld [vmem:[%s1178 + $0xf0] sm:$0xff]
        %v1580 = vld [vmem:[%s1178 + $0xf8] sm:$0xff]
        %v1581 = vld [vmem:[%s1178 + $0x108] sm:$0xff]
        %v1582 = vld [vmem:[%s1178 + $0x110] sm:$0xff]
        %v1583 = vld [vmem:[%s1178 + $0x120] sm:$0xff]
        %v1584 = vld [vmem:[%s1178 + $0x128] sm:$0xff]
        %v1585 = vld [vmem:[%s1178 + $0x138] sm:$0xff]
        %v1586 = vld [vmem:[%s1178 + $0x140] sm:$0xff]
        %v1587 = vld [vmem:[%s1178 + $0x150] sm:$0xff]
        %v1588 = vld [vmem:[%s1178 + $0x158] sm:$0xff]
        %v1589 = vld [vmem:[%s1178 + $0x168] sm:$0xff]
        %v1590 = vld [vmem:[%s1178 + $0x170] sm:$0xff]
        %v1591 = vlaneseq
        %v1592 = vshrl.u32 %v1591, 7
        %v1593 = vsub.s32 3, %v1592
        %v1594 = vrot.slane %v1257, %v1593
        %v1595 = vmul.f32 %v1559, %v1594
        %v1596 = vmul.f32 %v1560, %v1594
        %v1597 = vmul.f32 %v1561, %v1594
        %v1598 = vmul.f32 %v1562, %v1594
        %v1599 = vmul.f32 %v1563, %v1594
        %v1600 = vmul.f32 %v1564, %v1594
        %v1601 = vmul.f32 %v1565, %v1594
        %v1602 = vmul.f32 %v1566, %v1594
        %v1603 = vmul.f32 %v1567, %v1594
        %v1604 = vmul.f32 %v1568, %v1594
        %v1605 = vmul.f32 %v1569, %v1594
        %v1606 = vmul.f32 %v1570, %v1594
        %v1607 = vmul.f32 %v1571, %v1594
        %v1608 = vmul.f32 %v1572, %v1594
        %v1609 = vmul.f32 %v1573, %v1594
        %v1610 = vmul.f32 %v1574, %v1594
        %v1611 = vmul.f32 %v1575, %v1594
        %v1612 = vmul.f32 %v1576, %v1594
        %v1613 = vmul.f32 %v1577, %v1594
        %v1614 = vmul.f32 %v1578, %v1594
        %v1615 = vmul.f32 %v1579, %v1594
        %v1616 = vmul.f32 %v1580, %v1594
        %v1617 = vmul.f32 %v1581, %v1594
        %v1618 = vmul.f32 %v1582, %v1594
        %v1619 = vmul.f32 %v1583, %v1594
        %v1620 = vmul.f32 %v1584, %v1594
        %v1621 = vmul.f32 %v1585, %v1594
        %v1622 = vmul.f32 %v1586, %v1594
        %v1623 = vmul.f32 %v1587, %v1594
        %v1624 = vmul.f32 %v1588, %v1594
        %v1625 = vmul.f32 %v1589, %v1594
        %v1626 = vmul.f32 %v1590, %v1594
        %v1627 = vadd.f32 %v1527, %v1595
        %v1628 = vadd.f32 %v1528, %v1596
        %v1629 = vadd.f32 %v1529, %v1597
        %v1630 = vadd.f32 %v1530, %v1598
        %v1631 = vadd.f32 %v1531, %v1599
        %v1632 = vadd.f32 %v1532, %v1600
        %v1633 = vadd.f32 %v1533, %v1601
        %v1634 = vadd.f32 %v1534, %v1602
        %v1635 = vadd.f32 %v1535, %v1603
        %v1636 = vadd.f32 %v1536, %v1604
        %v1637 = vadd.f32 %v1537, %v1605
        %v1638 = vadd.f32 %v1538, %v1606
        %v1639 = vadd.f32 %v1539, %v1607
        %v1640 = vadd.f32 %v1540, %v1608
        %v1641 = vadd.f32 %v1541, %v1609
        %v1642 = vadd.f32 %v1542, %v1610
        %v1643 = vadd.f32 %v1543, %v1611
        %v1644 = vadd.f32 %v1544, %v1612
        %v1645 = vadd.f32 %v1545, %v1613
        %v1646 = vadd.f32 %v1546, %v1614
        %v1647 = vadd.f32 %v1547, %v1615
        %v1648 = vadd.f32 %v1548, %v1616
        %v1649 = vadd.f32 %v1549, %v1617
        %v1650 = vadd.f32 %v1550, %v1618
        %v1651 = vadd.f32 %v1551, %v1619
        %v1652 = vadd.f32 %v1552, %v1620
        %v1653 = vadd.f32 %v1553, %v1621
        %v1654 = vadd.f32 %v1554, %v1622
        %v1655 = vadd.f32 %v1555, %v1623
        %v1656 = vadd.f32 %v1556, %v1624
        %v1657 = vadd.f32 %v1557, %v1625
        %v1658 = vadd.f32 %v1558, %v1626
        %v1659 = vld [vmem:[%s1178 + $0x1] sm:$0xff]
        %v1660 = vld [vmem:[%s1178 + $0x9] sm:$0xff]
        %v1661 = vld [vmem:[%s1178 + $0x19] sm:$0xff]
        %v1662 = vld [vmem:[%s1178 + $0x21] sm:$0xff]
        %v1663 = vld [vmem:[%s1178 + $0x31] sm:$0xff]
        %v1664 = vld [vmem:[%s1178 + $0x39] sm:$0xff]
        %v1665 = vld [vmem:[%s1178 + $0x49] sm:$0xff]
        %v1666 = vld [vmem:[%s1178 + $0x51] sm:$0xff]
        %v1667 = vld [vmem:[%s1178 + $0x61] sm:$0xff]
        %v1668 = vld [vmem:[%s1178 + $0x69] sm:$0xff]
        %v1669 = vld [vmem:[%s1178 + $0x79] sm:$0xff]
        %v1670 = vld [vmem:[%s1178 + $0x81] sm:$0xff]
        %v1671 = vld [vmem:[%s1178 + $0x91] sm:$0xff]
        %v1672 = vld [vmem:[%s1178 + $0x99] sm:$0xff]
        %v1673 = vld [vmem:[%s1178 + $0xa9] sm:$0xff]
        %v1674 = vld [vmem:[%s1178 + $0xb1] sm:$0xff]
        %v1675 = vld [vmem:[%s1178 + $0xc1] sm:$0xff]
        %v1676 = vld [vmem:[%s1178 + $0xc9] sm:$0xff]
        %v1677 = vld [vmem:[%s1178 + $0xd9] sm:$0xff]
        %v1678 = vld [vmem:[%s1178 + $0xe1] sm:$0xff]
        %v1679 = vld [vmem:[%s1178 + $0xf1] sm:$0xff]
        %v1680 = vld [vmem:[%s1178 + $0xf9] sm:$0xff]
        %v1681 = vld [vmem:[%s1178 + $0x109] sm:$0xff]
        %v1682 = vld [vmem:[%s1178 + $0x111] sm:$0xff]
        %v1683 = vld [vmem:[%s1178 + $0x121] sm:$0xff]
        %v1684 = vld [vmem:[%s1178 + $0x129] sm:$0xff]
        %v1685 = vld [vmem:[%s1178 + $0x139] sm:$0xff]
        %v1686 = vld [vmem:[%s1178 + $0x141] sm:$0xff]
        %v1687 = vld [vmem:[%s1178 + $0x151] sm:$0xff]
        %v1688 = vld [vmem:[%s1178 + $0x159] sm:$0xff]
        %v1689 = vld [vmem:[%s1178 + $0x169] sm:$0xff]
        %v1690 = vld [vmem:[%s1178 + $0x171] sm:$0xff]
        %v1691 = vlaneseq
        %v1692 = vshrl.u32 %v1691, 7
        %v1693 = vsub.s32 4, %v1692
        %v1694 = vrot.slane %v1257, %v1693
        %v1695 = vmul.f32 %v1659, %v1694
        %v1696 = vmul.f32 %v1660, %v1694
        %v1697 = vmul.f32 %v1661, %v1694
        %v1698 = vmul.f32 %v1662, %v1694
        %v1699 = vmul.f32 %v1663, %v1694
        %v1700 = vmul.f32 %v1664, %v1694
        %v1701 = vmul.f32 %v1665, %v1694
        %v1702 = vmul.f32 %v1666, %v1694
        %v1703 = vmul.f32 %v1667, %v1694
        %v1704 = vmul.f32 %v1668, %v1694
        %v1705 = vmul.f32 %v1669, %v1694
        %v1706 = vmul.f32 %v1670, %v1694
        %v1707 = vmul.f32 %v1671, %v1694
        %v1708 = vmul.f32 %v1672, %v1694
        %v1709 = vmul.f32 %v1673, %v1694
        %v1710 = vmul.f32 %v1674, %v1694
        %v1711 = vmul.f32 %v1675, %v1694
        %v1712 = vmul.f32 %v1676, %v1694
        %v1713 = vmul.f32 %v1677, %v1694
        %v1714 = vmul.f32 %v1678, %v1694
        %v1715 = vmul.f32 %v1679, %v1694
        %v1716 = vmul.f32 %v1680, %v1694
        %v1717 = vmul.f32 %v1681, %v1694
        %v1718 = vmul.f32 %v1682, %v1694
        %v1719 = vmul.f32 %v1683, %v1694
        %v1720 = vmul.f32 %v1684, %v1694
        %v1721 = vmul.f32 %v1685, %v1694
        %v1722 = vmul.f32 %v1686, %v1694
        %v1723 = vmul.f32 %v1687, %v1694
        %v1724 = vmul.f32 %v1688, %v1694
        %v1725 = vmul.f32 %v1689, %v1694
        %v1726 = vmul.f32 %v1690, %v1694
        %v1727 = vadd.f32 %v1627, %v1695
        %v1728 = vadd.f32 %v1628, %v1696
        %v1729 = vadd.f32 %v1629, %v1697
        %v1730 = vadd.f32 %v1630, %v1698
        %v1731 = vadd.f32 %v1631, %v1699
        %v1732 = vadd.f32 %v1632, %v1700
        %v1733 = vadd.f32 %v1633, %v1701
        %v1734 = vadd.f32 %v1634, %v1702
        %v1735 = vadd.f32 %v1635, %v1703
        %v1736 = vadd.f32 %v1636, %v1704
        %v1737 = vadd.f32 %v1637, %v1705
        %v1738 = vadd.f32 %v1638, %v1706
        %v1739 = vadd.f32 %v1639, %v1707
        %v1740 = vadd.f32 %v1640, %v1708
        %v1741 = vadd.f32 %v1641, %v1709
        %v1742 = vadd.f32 %v1642, %v1710
        %v1743 = vadd.f32 %v1643, %v1711
        %v1744 = vadd.f32 %v1644, %v1712
        %v1745 = vadd.f32 %v1645, %v1713
        %v1746 = vadd.f32 %v1646, %v1714
        %v1747 = vadd.f32 %v1647, %v1715
        %v1748 = vadd.f32 %v1648, %v1716
        %v1749 = vadd.f32 %v1649, %v1717
        %v1750 = vadd.f32 %v1650, %v1718
        %v1751 = vadd.f32 %v1651, %v1719
        %v1752 = vadd.f32 %v1652, %v1720
        %v1753 = vadd.f32 %v1653, %v1721
        %v1754 = vadd.f32 %v1654, %v1722
        %v1755 = vadd.f32 %v1655, %v1723
        %v1756 = vadd.f32 %v1656, %v1724
        %v1757 = vadd.f32 %v1657, %v1725
        %v1758 = vadd.f32 %v1658, %v1726
        %v1759 = vld [vmem:[%s1178 + $0x2] sm:$0xff]
        %v1760 = vld [vmem:[%s1178 + $0xa] sm:$0xff]
        %v1761 = vld [vmem:[%s1178 + $0x1a] sm:$0xff]
        %v1762 = vld [vmem:[%s1178 + $0x22] sm:$0xff]
        %v1763 = vld [vmem:[%s1178 + $0x32] sm:$0xff]
        %v1764 = vld [vmem:[%s1178 + $0x3a] sm:$0xff]
        %v1765 = vld [vmem:[%s1178 + $0x4a] sm:$0xff]
        %v1766 = vld [vmem:[%s1178 + $0x52] sm:$0xff]
        %v1767 = vld [vmem:[%s1178 + $0x62] sm:$0xff]
        %v1768 = vld [vmem:[%s1178 + $0x6a] sm:$0xff]
        %v1769 = vld [vmem:[%s1178 + $0x7a] sm:$0xff]
        %v1770 = vld [vmem:[%s1178 + $0x82] sm:$0xff]
        %v1771 = vld [vmem:[%s1178 + $0x92] sm:$0xff]
        %v1772 = vld [vmem:[%s1178 + $0x9a] sm:$0xff]
        %v1773 = vld [vmem:[%s1178 + $0xaa] sm:$0xff]
        %v1774 = vld [vmem:[%s1178 + $0xb2] sm:$0xff]
        %v1775 = vld [vmem:[%s1178 + $0xc2] sm:$0xff]
        %v1776 = vld [vmem:[%s1178 + $0xca] sm:$0xff]
        %v1777 = vld [vmem:[%s1178 + $0xda] sm:$0xff]
        %v1778 = vld [vmem:[%s1178 + $0xe2] sm:$0xff]
        %v1779 = vld [vmem:[%s1178 + $0xf2] sm:$0xff]
        %v1780 = vld [vmem:[%s1178 + $0xfa] sm:$0xff]
        %v1781 = vld [vmem:[%s1178 + $0x10a] sm:$0xff]
        %v1782 = vld [vmem:[%s1178 + $0x112] sm:$0xff]
        %v1783 = vld [vmem:[%s1178 + $0x122] sm:$0xff]
        %v1784 = vld [vmem:[%s1178 + $0x12a] sm:$0xff]
        %v1785 = vld [vmem:[%s1178 + $0x13a] sm:$0xff]
        %v1786 = vld [vmem:[%s1178 + $0x142] sm:$0xff]
        %v1787 = vld [vmem:[%s1178 + $0x152] sm:$0xff]
        %v1788 = vld [vmem:[%s1178 + $0x15a] sm:$0xff]
        %v1789 = vld [vmem:[%s1178 + $0x16a] sm:$0xff]
        %v1790 = vld [vmem:[%s1178 + $0x172] sm:$0xff]
        %v1791 = vlaneseq
        %v1792 = vshrl.u32 %v1791, 7
        %v1793 = vsub.s32 5, %v1792
        %v1794 = vrot.slane %v1257, %v1793
        %v1795 = vmul.f32 %v1759, %v1794
        %v1796 = vmul.f32 %v1760, %v1794
        %v1797 = vmul.f32 %v1761, %v1794
        %v1798 = vmul.f32 %v1762, %v1794
        %v1799 = vmul.f32 %v1763, %v1794
        %v1800 = vmul.f32 %v1764, %v1794
        %v1801 = vmul.f32 %v1765, %v1794
        %v1802 = vmul.f32 %v1766, %v1794
        %v1803 = vmul.f32 %v1767, %v1794
        %v1804 = vmul.f32 %v1768, %v1794
        %v1805 = vmul.f32 %v1769, %v1794
        %v1806 = vmul.f32 %v1770, %v1794
        %v1807 = vmul.f32 %v1771, %v1794
        %v1808 = vmul.f32 %v1772, %v1794
        %v1809 = vmul.f32 %v1773, %v1794
        %v1810 = vmul.f32 %v1774, %v1794
        %v1811 = vmul.f32 %v1775, %v1794
        %v1812 = vmul.f32 %v1776, %v1794
        %v1813 = vmul.f32 %v1777, %v1794
        %v1814 = vmul.f32 %v1778, %v1794
        %v1815 = vmul.f32 %v1779, %v1794
        %v1816 = vmul.f32 %v1780, %v1794
        %v1817 = vmul.f32 %v1781, %v1794
        %v1818 = vmul.f32 %v1782, %v1794
        %v1819 = vmul.f32 %v1783, %v1794
        %v1820 = vmul.f32 %v1784, %v1794
        %v1821 = vmul.f32 %v1785, %v1794
        %v1822 = vmul.f32 %v1786, %v1794
        %v1823 = vmul.f32 %v1787, %v1794
        %v1824 = vmul.f32 %v1788, %v1794
        %v1825 = vmul.f32 %v1789, %v1794
        %v1826 = vmul.f32 %v1790, %v1794
        %v1827 = vadd.f32 %v1727, %v1795
        %v1828 = vadd.f32 %v1728, %v1796
        %v1829 = vadd.f32 %v1729, %v1797
        %v1830 = vadd.f32 %v1730, %v1798
        %v1831 = vadd.f32 %v1731, %v1799
        %v1832 = vadd.f32 %v1732, %v1800
        %v1833 = vadd.f32 %v1733, %v1801
        %v1834 = vadd.f32 %v1734, %v1802
        %v1835 = vadd.f32 %v1735, %v1803
        %v1836 = vadd.f32 %v1736, %v1804
        %v1837 = vadd.f32 %v1737, %v1805
        %v1838 = vadd.f32 %v1738, %v1806
        %v1839 = vadd.f32 %v1739, %v1807
        %v1840 = vadd.f32 %v1740, %v1808
        %v1841 = vadd.f32 %v1741, %v1809
        %v1842 = vadd.f32 %v1742, %v1810
        %v1843 = vadd.f32 %v1743, %v1811
        %v1844 = vadd.f32 %v1744, %v1812
        %v1845 = vadd.f32 %v1745, %v1813
        %v1846 = vadd.f32 %v1746, %v1814
        %v1847 = vadd.f32 %v1747, %v1815
        %v1848 = vadd.f32 %v1748, %v1816
        %v1849 = vadd.f32 %v1749, %v1817
        %v1850 = vadd.f32 %v1750, %v1818
        %v1851 = vadd.f32 %v1751, %v1819
        %v1852 = vadd.f32 %v1752, %v1820
        %v1853 = vadd.f32 %v1753, %v1821
        %v1854 = vadd.f32 %v1754, %v1822
        %v1855 = vadd.f32 %v1755, %v1823
        %v1856 = vadd.f32 %v1756, %v1824
        %v1857 = vadd.f32 %v1757, %v1825
        %v1858 = vadd.f32 %v1758, %v1826
        %s1859 = scalar_lea.vmem [#allocation2], 48
        %v1860 = vld [vmem:[%s1859] sm:$0xff]
        %v1861 = vld [vmem:[%s1859 + $0x8] sm:$0xff]
        %v1862 = vld [vmem:[%s1859 + $0x18] sm:$0xff]
        %v1863 = vld [vmem:[%s1859 + $0x20] sm:$0xff]
        %v1864 = vld [vmem:[%s1859 + $0x30] sm:$0xff]
        %v1865 = vld [vmem:[%s1859 + $0x38] sm:$0xff]
        %v1866 = vld [vmem:[%s1859 + $0x48] sm:$0xff]
        %v1867 = vld [vmem:[%s1859 + $0x50] sm:$0xff]
        %v1868 = vld [vmem:[%s1859 + $0x60] sm:$0xff]
        %v1869 = vld [vmem:[%s1859 + $0x68] sm:$0xff]
        %v1870 = vld [vmem:[%s1859 + $0x78] sm:$0xff]
        %v1871 = vld [vmem:[%s1859 + $0x80] sm:$0xff]
        %v1872 = vld [vmem:[%s1859 + $0x90] sm:$0xff]
        %v1873 = vld [vmem:[%s1859 + $0x98] sm:$0xff]
        %v1874 = vld [vmem:[%s1859 + $0xa8] sm:$0xff]
        %v1875 = vld [vmem:[%s1859 + $0xb0] sm:$0xff]
        %v1876 = vld [vmem:[%s1859 + $0xc0] sm:$0xff]
        %v1877 = vld [vmem:[%s1859 + $0xc8] sm:$0xff]
        %v1878 = vld [vmem:[%s1859 + $0xd8] sm:$0xff]
        %v1879 = vld [vmem:[%s1859 + $0xe0] sm:$0xff]
        %v1880 = vld [vmem:[%s1859 + $0xf0] sm:$0xff]
        %v1881 = vld [vmem:[%s1859 + $0xf8] sm:$0xff]
        %v1882 = vld [vmem:[%s1859 + $0x108] sm:$0xff]
        %v1883 = vld [vmem:[%s1859 + $0x110] sm:$0xff]
        %v1884 = vld [vmem:[%s1859 + $0x120] sm:$0xff]
        %v1885 = vld [vmem:[%s1859 + $0x128] sm:$0xff]
        %v1886 = vld [vmem:[%s1859 + $0x138] sm:$0xff]
        %v1887 = vld [vmem:[%s1859 + $0x140] sm:$0xff]
        %v1888 = vld [vmem:[%s1859 + $0x150] sm:$0xff]
        %v1889 = vld [vmem:[%s1859 + $0x158] sm:$0xff]
        %v1890 = vld [vmem:[%s1859 + $0x168] sm:$0xff]
        %v1891 = vld [vmem:[%s1859 + $0x170] sm:$0xff]
        %v1892 = vlaneseq
        %v1893 = vshrl.u32 %v1892, 7
        %v1894 = vsub.s32 6, %v1893
        %v1895 = vrot.slane %v1257, %v1894
        %v1896 = vmul.f32 %v1860, %v1895
        %v1897 = vmul.f32 %v1861, %v1895
        %v1898 = vmul.f32 %v1862, %v1895
        %v1899 = vmul.f32 %v1863, %v1895
        %v1900 = vmul.f32 %v1864, %v1895
        %v1901 = vmul.f32 %v1865, %v1895
        %v1902 = vmul.f32 %v1866, %v1895
        %v1903 = vmul.f32 %v1867, %v1895
        %v1904 = vmul.f32 %v1868, %v1895
        %v1905 = vmul.f32 %v1869, %v1895
        %v1906 = vmul.f32 %v1870, %v1895
        %v1907 = vmul.f32 %v1871, %v1895
        %v1908 = vmul.f32 %v1872, %v1895
        %v1909 = vmul.f32 %v1873, %v1895
        %v1910 = vmul.f32 %v1874, %v1895
        %v1911 = vmul.f32 %v1875, %v1895
        %v1912 = vmul.f32 %v1876, %v1895
        %v1913 = vmul.f32 %v1877, %v1895
        %v1914 = vmul.f32 %v1878, %v1895
        %v1915 = vmul.f32 %v1879, %v1895
        %v1916 = vmul.f32 %v1880, %v1895
        %v1917 = vmul.f32 %v1881, %v1895
        %v1918 = vmul.f32 %v1882, %v1895
        %v1919 = vmul.f32 %v1883, %v1895
        %v1920 = vmul.f32 %v1884, %v1895
        %v1921 = vmul.f32 %v1885, %v1895
        %v1922 = vmul.f32 %v1886, %v1895
        %v1923 = vmul.f32 %v1887, %v1895
        %v1924 = vmul.f32 %v1888, %v1895
        %v1925 = vmul.f32 %v1889, %v1895
        %v1926 = vmul.f32 %v1890, %v1895
        %v1927 = vmul.f32 %v1891, %v1895
        %v1928 = vadd.f32 %v1827, %v1896
        %v1929 = vadd.f32 %v1828, %v1897
        %v1930 = vadd.f32 %v1829, %v1898
        %v1931 = vadd.f32 %v1830, %v1899
        %v1932 = vadd.f32 %v1831, %v1900
        %v1933 = vadd.f32 %v1832, %v1901
        %v1934 = vadd.f32 %v1833, %v1902
        %v1935 = vadd.f32 %v1834, %v1903
        %v1936 = vadd.f32 %v1835, %v1904
        %v1937 = vadd.f32 %v1836, %v1905
        %v1938 = vadd.f32 %v1837, %v1906
        %v1939 = vadd.f32 %v1838, %v1907
        %v1940 = vadd.f32 %v1839, %v1908
        %v1941 = vadd.f32 %v1840, %v1909
        %v1942 = vadd.f32 %v1841, %v1910
        %v1943 = vadd.f32 %v1842, %v1911
        %v1944 = vadd.f32 %v1843, %v1912
        %v1945 = vadd.f32 %v1844, %v1913
        %v1946 = vadd.f32 %v1845, %v1914
        %v1947 = vadd.f32 %v1846, %v1915
        %v1948 = vadd.f32 %v1847, %v1916
        %v1949 = vadd.f32 %v1848, %v1917
        %v1950 = vadd.f32 %v1849, %v1918
        %v1951 = vadd.f32 %v1850, %v1919
        %v1952 = vadd.f32 %v1851, %v1920
        %v1953 = vadd.f32 %v1852, %v1921
        %v1954 = vadd.f32 %v1853, %v1922
        %v1955 = vadd.f32 %v1854, %v1923
        %v1956 = vadd.f32 %v1855, %v1924
        %v1957 = vadd.f32 %v1856, %v1925
        %v1958 = vadd.f32 %v1857, %v1926
        %v1959 = vadd.f32 %v1858, %v1927
        %v1960 = vld [vmem:[%s1859 + $0x1] sm:$0xff]
        %v1961 = vld [vmem:[%s1859 + $0x9] sm:$0xff]
        %v1962 = vld [vmem:[%s1859 + $0x19] sm:$0xff]
        %v1963 = vld [vmem:[%s1859 + $0x21] sm:$0xff]
        %v1964 = vld [vmem:[%s1859 + $0x31] sm:$0xff]
        %v1965 = vld [vmem:[%s1859 + $0x39] sm:$0xff]
        %v1966 = vld [vmem:[%s1859 + $0x49] sm:$0xff]
        %v1967 = vld [vmem:[%s1859 + $0x51] sm:$0xff]
        %v1968 = vld [vmem:[%s1859 + $0x61] sm:$0xff]
        %v1969 = vld [vmem:[%s1859 + $0x69] sm:$0xff]
        %v1970 = vld [vmem:[%s1859 + $0x79] sm:$0xff]
        %v1971 = vld [vmem:[%s1859 + $0x81] sm:$0xff]
        %v1972 = vld [vmem:[%s1859 + $0x91] sm:$0xff]
        %v1973 = vld [vmem:[%s1859 + $0x99] sm:$0xff]
        %v1974 = vld [vmem:[%s1859 + $0xa9] sm:$0xff]
        %v1975 = vld [vmem:[%s1859 + $0xb1] sm:$0xff]
        %v1976 = vld [vmem:[%s1859 + $0xc1] sm:$0xff]
        %v1977 = vld [vmem:[%s1859 + $0xc9] sm:$0xff]
        %v1978 = vld [vmem:[%s1859 + $0xd9] sm:$0xff]
        %v1979 = vld [vmem:[%s1859 + $0xe1] sm:$0xff]
        %v1980 = vld [vmem:[%s1859 + $0xf1] sm:$0xff]
        %v1981 = vld [vmem:[%s1859 + $0xf9] sm:$0xff]
        %v1982 = vld [vmem:[%s1859 + $0x109] sm:$0xff]
        %v1983 = vld [vmem:[%s1859 + $0x111] sm:$0xff]
        %v1984 = vld [vmem:[%s1859 + $0x121] sm:$0xff]
        %v1985 = vld [vmem:[%s1859 + $0x129] sm:$0xff]
        %v1986 = vld [vmem:[%s1859 + $0x139] sm:$0xff]
        %v1987 = vld [vmem:[%s1859 + $0x141] sm:$0xff]
        %v1988 = vld [vmem:[%s1859 + $0x151] sm:$0xff]
        %v1989 = vld [vmem:[%s1859 + $0x159] sm:$0xff]
        %v1990 = vld [vmem:[%s1859 + $0x169] sm:$0xff]
        %v1991 = vld [vmem:[%s1859 + $0x171] sm:$0xff]
        %v1992 = vlaneseq
        %v1993 = vshrl.u32 %v1992, 7
        %v1994 = vsub.s32 7, %v1993
        %v1995 = vrot.slane %v1257, %v1994
        %v1996 = vmul.f32 %v1960, %v1995
        %v1997 = vmul.f32 %v1961, %v1995
        %v1998 = vmul.f32 %v1962, %v1995
        %v1999 = vmul.f32 %v1963, %v1995
        %v2000 = vmul.f32 %v1964, %v1995
        %v2001 = vmul.f32 %v1965, %v1995
        %v2002 = vmul.f32 %v1966, %v1995
        %v2003 = vmul.f32 %v1967, %v1995
        %v2004 = vmul.f32 %v1968, %v1995
        %v2005 = vmul.f32 %v1969, %v1995
        %v2006 = vmul.f32 %v1970, %v1995
        %v2007 = vmul.f32 %v1971, %v1995
        %v2008 = vmul.f32 %v1972, %v1995
        %v2009 = vmul.f32 %v1973, %v1995
        %v2010 = vmul.f32 %v1974, %v1995
        %v2011 = vmul.f32 %v1975, %v1995
        %v2012 = vmul.f32 %v1976, %v1995
        %v2013 = vmul.f32 %v1977, %v1995
        %v2014 = vmul.f32 %v1978, %v1995
        %v2015 = vmul.f32 %v1979, %v1995
        %v2016 = vmul.f32 %v1980, %v1995
        %v2017 = vmul.f32 %v1981, %v1995
        %v2018 = vmul.f32 %v1982, %v1995
        %v2019 = vmul.f32 %v1983, %v1995
        %v2020 = vmul.f32 %v1984, %v1995
        %v2021 = vmul.f32 %v1985, %v1995
        %v2022 = vmul.f32 %v1986, %v1995
        %v2023 = vmul.f32 %v1987, %v1995
        %v2024 = vmul.f32 %v1988, %v1995
        %v2025 = vmul.f32 %v1989, %v1995
        %v2026 = vmul.f32 %v1990, %v1995
        %v2027 = vmul.f32 %v1991, %v1995
        %v2028 = vadd.f32 %v1928, %v1996
        %v2029 = vadd.f32 %v1929, %v1997
        %v2030 = vadd.f32 %v1930, %v1998
        %v2031 = vadd.f32 %v1931, %v1999
        %v2032 = vadd.f32 %v1932, %v2000
        %v2033 = vadd.f32 %v1933, %v2001
        %v2034 = vadd.f32 %v1934, %v2002
        %v2035 = vadd.f32 %v1935, %v2003
        %v2036 = vadd.f32 %v1936, %v2004
        %v2037 = vadd.f32 %v1937, %v2005
        %v2038 = vadd.f32 %v1938, %v2006
        %v2039 = vadd.f32 %v1939, %v2007
        %v2040 = vadd.f32 %v1940, %v2008
        %v2041 = vadd.f32 %v1941, %v2009
        %v2042 = vadd.f32 %v1942, %v2010
        %v2043 = vadd.f32 %v1943, %v2011
        %v2044 = vadd.f32 %v1944, %v2012
        %v2045 = vadd.f32 %v1945, %v2013
        %v2046 = vadd.f32 %v1946, %v2014
        %v2047 = vadd.f32 %v1947, %v2015
        %v2048 = vadd.f32 %v1948, %v2016
        %v2049 = vadd.f32 %v1949, %v2017
        %v2050 = vadd.f32 %v1950, %v2018
        %v2051 = vadd.f32 %v1951, %v2019
        %v2052 = vadd.f32 %v1952, %v2020
        %v2053 = vadd.f32 %v1953, %v2021
        %v2054 = vadd.f32 %v1954, %v2022
        %v2055 = vadd.f32 %v1955, %v2023
        %v2056 = vadd.f32 %v1956, %v2024
        %v2057 = vadd.f32 %v1957, %v2025
        %v2058 = vadd.f32 %v1958, %v2026
        %v2059 = vadd.f32 %v1959, %v2027
        %v2060 = vld [vmem:[%s1859 + $0x2] sm:$0xff]
        %v2061 = vld [vmem:[%s1859 + $0xa] sm:$0xff]
        %v2062 = vld [vmem:[%s1859 + $0x1a] sm:$0xff]
        %v2063 = vld [vmem:[%s1859 + $0x22] sm:$0xff]
        %v2064 = vld [vmem:[%s1859 + $0x32] sm:$0xff]
        %v2065 = vld [vmem:[%s1859 + $0x3a] sm:$0xff]
        %v2066 = vld [vmem:[%s1859 + $0x4a] sm:$0xff]
        %v2067 = vld [vmem:[%s1859 + $0x52] sm:$0xff]
        %v2068 = vld [vmem:[%s1859 + $0x62] sm:$0xff]
        %v2069 = vld [vmem:[%s1859 + $0x6a] sm:$0xff]
        %v2070 = vld [vmem:[%s1859 + $0x7a] sm:$0xff]
        %v2071 = vld [vmem:[%s1859 + $0x82] sm:$0xff]
        %v2072 = vld [vmem:[%s1859 + $0x92] sm:$0xff]
        %v2073 = vld [vmem:[%s1859 + $0x9a] sm:$0xff]
        %v2074 = vld [vmem:[%s1859 + $0xaa] sm:$0xff]
        %v2075 = vld [vmem:[%s1859 + $0xb2] sm:$0xff]
        %v2076 = vld [vmem:[%s1859 + $0xc2] sm:$0xff]
        %v2077 = vld [vmem:[%s1859 + $0xca] sm:$0xff]
        %v2078 = vld [vmem:[%s1859 + $0xda] sm:$0xff]
        %v2079 = vld [vmem:[%s1859 + $0xe2] sm:$0xff]
        %v2080 = vld [vmem:[%s1859 + $0xf2] sm:$0xff]
        %v2081 = vld [vmem:[%s1859 + $0xfa] sm:$0xff]
        %v2082 = vld [vmem:[%s1859 + $0x10a] sm:$0xff]
        %v2083 = vld [vmem:[%s1859 + $0x112] sm:$0xff]
        %v2084 = vld [vmem:[%s1859 + $0x122] sm:$0xff]
        %v2085 = vld [vmem:[%s1859 + $0x12a] sm:$0xff]
        %v2086 = vld [vmem:[%s1859 + $0x13a] sm:$0xff]
        %v2087 = vld [vmem:[%s1859 + $0x142] sm:$0xff]
        %v2088 = vld [vmem:[%s1859 + $0x152] sm:$0xff]
        %v2089 = vld [vmem:[%s1859 + $0x15a] sm:$0xff]
        %v2090 = vld [vmem:[%s1859 + $0x16a] sm:$0xff]
        %v2091 = vld [vmem:[%s1859 + $0x172] sm:$0xff]
        %v2092 = vlaneseq
        %v2093 = vshrl.u32 %v2092, 7
        %v2094 = vsub.s32 0, %v2093
        %v2095 = vrot.slane %v1258, %v2094
        %v2096 = vmul.f32 %v2060, %v2095
        %v2097 = vmul.f32 %v2061, %v2095
        %v2098 = vmul.f32 %v2062, %v2095
        %v2099 = vmul.f32 %v2063, %v2095
        %v2100 = vmul.f32 %v2064, %v2095
        %v2101 = vmul.f32 %v2065, %v2095
        %v2102 = vmul.f32 %v2066, %v2095
        %v2103 = vmul.f32 %v2067, %v2095
        %v2104 = vmul.f32 %v2068, %v2095
        %v2105 = vmul.f32 %v2069, %v2095
        %v2106 = vmul.f32 %v2070, %v2095
        %v2107 = vmul.f32 %v2071, %v2095
        %v2108 = vmul.f32 %v2072, %v2095
        %v2109 = vmul.f32 %v2073, %v2095
        %v2110 = vmul.f32 %v2074, %v2095
        %v2111 = vmul.f32 %v2075, %v2095
        %v2112 = vmul.f32 %v2076, %v2095
        %v2113 = vmul.f32 %v2077, %v2095
        %v2114 = vmul.f32 %v2078, %v2095
        %v2115 = vmul.f32 %v2079, %v2095
        %v2116 = vmul.f32 %v2080, %v2095
        %v2117 = vmul.f32 %v2081, %v2095
        %v2118 = vmul.f32 %v2082, %v2095
        %v2119 = vmul.f32 %v2083, %v2095
        %v2120 = vmul.f32 %v2084, %v2095
        %v2121 = vmul.f32 %v2085, %v2095
        %v2122 = vmul.f32 %v2086, %v2095
        %v2123 = vmul.f32 %v2087, %v2095
        %v2124 = vmul.f32 %v2088, %v2095
        %v2125 = vmul.f32 %v2089, %v2095
        %v2126 = vmul.f32 %v2090, %v2095
        %v2127 = vmul.f32 %v2091, %v2095
        %v2128 = vadd.f32 %v2028, %v2096
        %v2129 = vadd.f32 %v2029, %v2097
        %v2130 = vadd.f32 %v2030, %v2098
        %v2131 = vadd.f32 %v2031, %v2099
        %v2132 = vadd.f32 %v2032, %v2100
        %v2133 = vadd.f32 %v2033, %v2101
        %v2134 = vadd.f32 %v2034, %v2102
        %v2135 = vadd.f32 %v2035, %v2103
        %v2136 = vadd.f32 %v2036, %v2104
        %v2137 = vadd.f32 %v2037, %v2105
        %v2138 = vadd.f32 %v2038, %v2106
        %v2139 = vadd.f32 %v2039, %v2107
        %v2140 = vadd.f32 %v2040, %v2108
        %v2141 = vadd.f32 %v2041, %v2109
        %v2142 = vadd.f32 %v2042, %v2110
        %v2143 = vadd.f32 %v2043, %v2111
        %v2144 = vadd.f32 %v2044, %v2112
        %v2145 = vadd.f32 %v2045, %v2113
        %v2146 = vadd.f32 %v2046, %v2114
        %v2147 = vadd.f32 %v2047, %v2115
        %v2148 = vadd.f32 %v2048, %v2116
        %v2149 = vadd.f32 %v2049, %v2117
        %v2150 = vadd.f32 %v2050, %v2118
        %v2151 = vadd.f32 %v2051, %v2119
        %v2152 = vadd.f32 %v2052, %v2120
        %v2153 = vadd.f32 %v2053, %v2121
        %v2154 = vadd.f32 %v2054, %v2122
        %v2155 = vadd.f32 %v2055, %v2123
        %v2156 = vadd.f32 %v2056, %v2124
        %v2157 = vadd.f32 %v2057, %v2125
        %v2158 = vadd.f32 %v2058, %v2126
        %v2159 = vadd.f32 %v2059, %v2127
        %v2160 = vld [vmem:[%s6] sm:$0x1]
        %v2162 = vlaneseq
        %v2163 = vshrl.u32 %v2162, 7
        %v2164 = vsub.s32 0, %v2163
        %v2165 = vrot.slane %v2160, %v2164
        %v2167 = vadd.f32 %v2128, %v2165
        %v2168 = vadd.f32 %v2129, %v2165
        %v2169 = vadd.f32 %v2130, %v2165
        %v2170 = vadd.f32 %v2131, %v2165
        %v2171 = vadd.f32 %v2132, %v2165
        %v2172 = vadd.f32 %v2133, %v2165
        %v2173 = vadd.f32 %v2134, %v2165
        %v2174 = vadd.f32 %v2135, %v2165
        %v2175 = vadd.f32 %v2136, %v2165
        %v2176 = vadd.f32 %v2137, %v2165
        %v2177 = vadd.f32 %v2138, %v2165
        %v2178 = vadd.f32 %v2139, %v2165
        %v2179 = vadd.f32 %v2140, %v2165
        %v2180 = vadd.f32 %v2141, %v2165
        %v2181 = vadd.f32 %v2142, %v2165
        %v2182 = vadd.f32 %v2143, %v2165
        %v2183 = vadd.f32 %v2144, %v2165
        %v2184 = vadd.f32 %v2145, %v2165
        %v2185 = vadd.f32 %v2146, %v2165
        %v2186 = vadd.f32 %v2147, %v2165
        %v2187 = vadd.f32 %v2148, %v2165
        %v2188 = vadd.f32 %v2149, %v2165
        %v2189 = vadd.f32 %v2150, %v2165
        %v2190 = vadd.f32 %v2151, %v2165
        %v2191 = vadd.f32 %v2152, %v2165
        %v2192 = vadd.f32 %v2153, %v2165
        %v2193 = vadd.f32 %v2154, %v2165
        %v2194 = vadd.f32 %v2155, %v2165
        %v2195 = vadd.f32 %v2156, %v2165
        %v2196 = vadd.f32 %v2157, %v2165
        %v2197 = vadd.f32 %v2158, %v2165
        %v2198 = vadd.f32 %v2159, %v2165
        %vm2199 = vcmask 130048
        %2200 = vst.msk [vmem:[%s299] sm:$0xff] %vm2199, %v2167
        %2201 = vst.msk [vmem:[%s299 + $0x8] sm:$0xff] %vm2199, %v2168
        %2202 = vst.msk [vmem:[%s299 + $0x10] sm:$0xff] %vm2199, %v2169
        %2203 = vst.msk [vmem:[%s299 + $0x18] sm:$0xff] %vm2199, %v2170
        %2204 = vst.msk [vmem:[%s299 + $0x20] sm:$0xff] %vm2199, %v2171
        %2205 = vst.msk [vmem:[%s299 + $0x28] sm:$0xff] %vm2199, %v2172
        %2206 = vst.msk [vmem:[%s299 + $0x30] sm:$0xff] %vm2199, %v2173
        %2207 = vst.msk [vmem:[%s299 + $0x38] sm:$0xff] %vm2199, %v2174
        %2208 = vst.msk [vmem:[%s299 + $0x40] sm:$0xff] %vm2199, %v2175
        %2209 = vst.msk [vmem:[%s299 + $0x48] sm:$0xff] %vm2199, %v2176
        %2210 = vst.msk [vmem:[%s299 + $0x50] sm:$0xff] %vm2199, %v2177
        %2211 = vst.msk [vmem:[%s299 + $0x58] sm:$0xff] %vm2199, %v2178
        %2212 = vst.msk [vmem:[%s299 + $0x60] sm:$0xff] %vm2199, %v2179
        %2213 = vst.msk [vmem:[%s299 + $0x68] sm:$0xff] %vm2199, %v2180
        %2214 = vst.msk [vmem:[%s299 + $0x70] sm:$0xff] %vm2199, %v2181
        %2215 = vst.msk [vmem:[%s299 + $0x78] sm:$0xff] %vm2199, %v2182
        %2216 = vst.msk [vmem:[%s299 + $0x80] sm:$0xff] %vm2199, %v2183
        %2217 = vst.msk [vmem:[%s299 + $0x88] sm:$0xff] %vm2199, %v2184
        %2218 = vst.msk [vmem:[%s299 + $0x90] sm:$0xff] %vm2199, %v2185
        %2219 = vst.msk [vmem:[%s299 + $0x98] sm:$0xff] %vm2199, %v2186
        %2220 = vst.msk [vmem:[%s299 + $0xa0] sm:$0xff] %vm2199, %v2187
        %2221 = vst.msk [vmem:[%s299 + $0xa8] sm:$0xff] %vm2199, %v2188
        %2222 = vst.msk [vmem:[%s299 + $0xb0] sm:$0xff] %vm2199, %v2189
        %2223 = vst.msk [vmem:[%s299 + $0xb8] sm:$0xff] %vm2199, %v2190
        %2224 = vst.msk [vmem:[%s299 + $0xc0] sm:$0xff] %vm2199, %v2191
        %2225 = vst.msk [vmem:[%s299 + $0xc8] sm:$0xff] %vm2199, %v2192
        %2226 = vst.msk [vmem:[%s299 + $0xd0] sm:$0xff] %vm2199, %v2193
        %2227 = vst.msk [vmem:[%s299 + $0xd8] sm:$0xff] %vm2199, %v2194
        %2228 = vst.msk [vmem:[%s299 + $0xe0] sm:$0xff] %vm2199, %v2195
        %2229 = vst.msk [vmem:[%s299 + $0xe8] sm:$0xff] %vm2199, %v2196
        %2230 = vst.msk [vmem:[%s299 + $0xf0] sm:$0xff] %vm2199, %v2197
        %2231 = vst.msk [vmem:[%s299 + $0xf8] sm:$0xff] %vm2199, %v2198
        %2264 = vrot.lane.b32.xlu0 %v2167, 112
        %v2265 = vpop.permute.xlu0 %2264
        %2266 = vrot.lane.b32.xlu0 %v2168, 112
        %v2267 = vpop.permute.xlu0 %2266
        %2268 = vrot.lane.b32.xlu0 %v2169, 112
        %v2269 = vpop.permute.xlu0 %2268
        %2270 = vrot.lane.b32.xlu0 %v2170, 112
        %v2271 = vpop.permute.xlu0 %2270
        %2272 = vrot.lane.b32.xlu0 %v2171, 112
        %v2273 = vpop.permute.xlu0 %2272
        %2274 = vrot.lane.b32.xlu0 %v2172, 112
        %v2275 = vpop.permute.xlu0 %2274
        %2276 = vrot.lane.b32.xlu0 %v2173, 112
        %v2277 = vpop.permute.xlu0 %2276
        %2278 = vrot.lane.b32.xlu0 %v2174, 112
        %v2279 = vpop.permute.xlu0 %2278
        %2280 = vrot.lane.b32.xlu0 %v2175, 112
        %v2281 = vpop.permute.xlu0 %2280
        %2282 = vrot.lane.b32.xlu0 %v2176, 112
        %v2283 = vpop.permute.xlu0 %2282
        %2284 = vrot.lane.b32.xlu0 %v2177, 112
        %v2285 = vpop.permute.xlu0 %2284
        %2286 = vrot.lane.b32.xlu0 %v2178, 112
        %v2287 = vpop.permute.xlu0 %2286
        %2288 = vrot.lane.b32.xlu0 %v2179, 112
        %v2289 = vpop.permute.xlu0 %2288
        %2290 = vrot.lane.b32.xlu0 %v2180, 112
        %v2291 = vpop.permute.xlu0 %2290
        %2292 = vrot.lane.b32.xlu0 %v2181, 112
        %v2293 = vpop.permute.xlu0 %2292
        %2294 = vrot.lane.b32.xlu0 %v2182, 112
        %v2295 = vpop.permute.xlu0 %2294
        %2296 = vrot.lane.b32.xlu0 %v2183, 112
        %v2297 = vpop.permute.xlu0 %2296
        %2298 = vrot.lane.b32.xlu0 %v2184, 112
        %v2299 = vpop.permute.xlu0 %2298
        %2300 = vrot.lane.b32.xlu0 %v2185, 112
        %v2301 = vpop.permute.xlu0 %2300
        %2302 = vrot.lane.b32.xlu0 %v2186, 112
        %v2303 = vpop.permute.xlu0 %2302
        %2304 = vrot.lane.b32.xlu0 %v2187, 112
        %v2305 = vpop.permute.xlu0 %2304
        %2306 = vrot.lane.b32.xlu0 %v2188, 112
        %v2307 = vpop.permute.xlu0 %2306
        %2308 = vrot.lane.b32.xlu0 %v2189, 112
        %v2309 = vpop.permute.xlu0 %2308
        %2310 = vrot.lane.b32.xlu0 %v2190, 112
        %v2311 = vpop.permute.xlu0 %2310
        %2312 = vrot.lane.b32.xlu0 %v2191, 112
        %v2313 = vpop.permute.xlu0 %2312
        %2314 = vrot.lane.b32.xlu0 %v2192, 112
        %v2315 = vpop.permute.xlu0 %2314
        %2316 = vrot.lane.b32.xlu0 %v2193, 112
        %v2317 = vpop.permute.xlu0 %2316
        %2318 = vrot.lane.b32.xlu0 %v2194, 112
        %v2319 = vpop.permute.xlu0 %2318
        %2320 = vrot.lane.b32.xlu0 %v2195, 112
        %v2321 = vpop.permute.xlu0 %2320
        %2322 = vrot.lane.b32.xlu0 %v2196, 112
        %v2323 = vpop.permute.xlu0 %2322
        %2324 = vrot.lane.b32.xlu0 %v2197, 112
        %v2325 = vpop.permute.xlu0 %2324
        %2326 = vrot.lane.b32.xlu0 %v2198, 112
        %v2327 = vpop.permute.xlu0 %2326
        %vm2360 = vcmask 64512
        %2361 = vst.msk [vmem:[%s316] sm:$0xff] %vm2360, %v2265
        %2362 = vst.msk [vmem:[%s316 + $0x8] sm:$0xff] %vm2360, %v2267
        %2363 = vst.msk [vmem:[%s316 + $0x10] sm:$0xff] %vm2360, %v2269
        %2364 = vst.msk [vmem:[%s316 + $0x18] sm:$0xff] %vm2360, %v2271
        %2365 = vst.msk [vmem:[%s316 + $0x20] sm:$0xff] %vm2360, %v2273
        %2366 = vst.msk [vmem:[%s316 + $0x28] sm:$0xff] %vm2360, %v2275
        %2367 = vst.msk [vmem:[%s316 + $0x30] sm:$0xff] %vm2360, %v2277
        %2368 = vst.msk [vmem:[%s316 + $0x38] sm:$0xff] %vm2360, %v2279
        %2369 = vst.msk [vmem:[%s316 + $0x40] sm:$0xff] %vm2360, %v2281
        %2370 = vst.msk [vmem:[%s316 + $0x48] sm:$0xff] %vm2360, %v2283
        %2371 = vst.msk [vmem:[%s316 + $0x50] sm:$0xff] %vm2360, %v2285
        %2372 = vst.msk [vmem:[%s316 + $0x58] sm:$0xff] %vm2360, %v2287
        %2373 = vst.msk [vmem:[%s316 + $0x60] sm:$0xff] %vm2360, %v2289
        %2374 = vst.msk [vmem:[%s316 + $0x68] sm:$0xff] %vm2360, %v2291
        %2375 = vst.msk [vmem:[%s316 + $0x70] sm:$0xff] %vm2360, %v2293
        %2376 = vst.msk [vmem:[%s316 + $0x78] sm:$0xff] %vm2360, %v2295
        %2377 = vst.msk [vmem:[%s316 + $0x80] sm:$0xff] %vm2360, %v2297
        %2378 = vst.msk [vmem:[%s316 + $0x88] sm:$0xff] %vm2360, %v2299
        %2379 = vst.msk [vmem:[%s316 + $0x90] sm:$0xff] %vm2360, %v2301
        %2380 = vst.msk [vmem:[%s316 + $0x98] sm:$0xff] %vm2360, %v2303
        %2381 = vst.msk [vmem:[%s316 + $0xa0] sm:$0xff] %vm2360, %v2305
        %2382 = vst.msk [vmem:[%s316 + $0xa8] sm:$0xff] %vm2360, %v2307
        %2383 = vst.msk [vmem:[%s316 + $0xb0] sm:$0xff] %vm2360, %v2309
        %2384 = vst.msk [vmem:[%s316 + $0xb8] sm:$0xff] %vm2360, %v2311
        %2385 = vst.msk [vmem:[%s316 + $0xc0] sm:$0xff] %vm2360, %v2313
        %2386 = vst.msk [vmem:[%s316 + $0xc8] sm:$0xff] %vm2360, %v2315
        %2387 = vst.msk [vmem:[%s316 + $0xd0] sm:$0xff] %vm2360, %v2317
        %2388 = vst.msk [vmem:[%s316 + $0xd8] sm:$0xff] %vm2360, %v2319
        %2389 = vst.msk [vmem:[%s316 + $0xe0] sm:$0xff] %vm2360, %v2321
        %2390 = vst.msk [vmem:[%s316 + $0xe8] sm:$0xff] %vm2360, %v2323
        %2391 = vst.msk [vmem:[%s316 + $0xf0] sm:$0xff] %vm2360, %v2325
        %2392 = vst.msk [vmem:[%s316 + $0xf8] sm:$0xff] %vm2360, %v2327
        %s2393 = sand.u32 %s183, 1
        %s2394 = scalar_lea.sflag [#allocation4], %s2393
        %s2395 = sand.u32 %s183, 1
        %s2396 = smul.addr %s2395, 256
        %s2397 = scalar_lea.vmem [#allocation3], %s2396
        %p2398 = scmp.lt.s32.totalorder %s23, 1
        %s2399 = scalar_select %p2398, %s23, 1
        %s2400 = smul.addr %s2399, 32
        %s2401 = smul.addr %s2400, 8
        %s2402 = scalar_lea.vmem %s8, %s2401
        // Predicated region
        $region49: #{tpu_custom_call.1} parent=47 // pred_check
          %p2403 = pneg %p193
        $region50: #{tpu_custom_call.1} parent=47 // pred_check_branch
          %2405 = sbr.rel (%p2403) target = $region52
        $region51: #{tpu_custom_call.1} parent=47 // pred_region
          %s2407 = ssub.s32 4096, 4096
          %2408 = vsyncadd %s2394, %s2407
          %s2409 = smul.addr %s23, 32
          %s2410 = smul.addr %s2409, 128
          %s2411 = scalar_lea.hbm %s7, %s2410
          %s2412 = sshll.u32 %s2397, 4
          %s2413 = int_to_ptr.vmem [resolvable:$true] %s2412
          %2418 = dma.vmem_to_hbm [thread:$0]  %s2413, 4096, %s2411, %s2394, 128, 128, 8
        $region52: #{tpu_custom_call.1} parent=47 // pred_fallthru
          _
        // Predicated region
        $region53: #{tpu_custom_call.1} parent=47 // pred_check
          %p2419 = pneg %p219
        $region54: #{tpu_custom_call.1} parent=47 // pred_check_branch
          %2421 = sbr.rel (%p2419) target = $region56
        $region55: #{tpu_custom_call.1} parent=47 // pred_region
          _
        $region56: #{tpu_custom_call.1} parent=47 // pred_fallthru
          _
      $region48: #{tpu_custom_call.1} parent=5 // pred_fallthru
        _
      %p2422 = scmp.le.s32.totalorder 2, %s18
      // Predicated region
      $region57: #{tpu_custom_call.1} parent=5 // pred_check
        %p2423 = pneg %p2422
      $region58: #{tpu_custom_call.1} parent=5 // pred_check_branch
        %2425 = sbr.rel (%p2423) target = $region60
      $region59: #{tpu_custom_call.1} parent=5 // pred_region
        %s2426 = ssub.s32 %s18, 2
        // Predicated region
        $region61: #{tpu_custom_call.1} parent=59 // pred_check
          %p2427 = pneg %p199
        $region62: #{tpu_custom_call.1} parent=59 // pred_check_branch
          %2429 = sbr.rel (%p2427) target = $region64
        $region63: #{tpu_custom_call.1} parent=59 // pred_region
          %s2430 = sand.u32 %s184, 1
          %s2431 = scalar_lea.sflag [#allocation4], %s2430
          %s2432 = sand.u32 %s184, 1
          %s2433 = smul.addr %s2432, 256
          %s2434 = scalar_lea.vmem [#allocation3], %s2433
          %2435 = dma.done %s2431, 4096
        $region64: #{tpu_custom_call.1} parent=59 // pred_fallthru
          _
        // Predicated region
        $region65: #{tpu_custom_call.1} parent=59 // pred_check
          %p2436 = pneg %p225
        $region66: #{tpu_custom_call.1} parent=59 // pred_check_branch
          %2438 = sbr.rel (%p2436) target = $region68
        $region67: #{tpu_custom_call.1} parent=59 // pred_region
          %p2439 = scmp.lt.s32.totalorder %s24, 1
          %s2440 = scalar_select %p2439, %s24, 1
          %s2441 = smul.addr %s2440, 32
          %s2442 = smul.addr %s2441, 8
          %s2443 = scalar_lea.vmem %s8, %s2442
        $region68: #{tpu_custom_call.1} parent=59 // pred_fallthru
          _
      $region60: #{tpu_custom_call.1} parent=5 // pred_fallthru
        _
    $region6: #{tpu_custom_call.1} parent=1 // loop_footer
      %s22 = sadd.s32 1, %s18
    $region7: #{tpu_custom_call.1} parent=1 // loop_footer_branch
      %17 = sbr.rel target = $region3
    $region8: #{tpu_custom_call.1} parent=1 // loop_exit
      _
    %2444 = vsyncpa [#allocation4], 1
    %s2445 = scalar_lea.sflag [#allocation4], 1
    %2446 = vsyncpa %s2445, 1

</llo_original>
